<compile_context>
chip_gen: v7x
topology: tpu7x:2x2x1
jax: 0.10.0
libtpu: 0.0.40
codegen_flags: <defaults>
</compile_context>

<pallas_src>
import functools

import jax
import jax.numpy as jnp
from jax.experimental import pallas as pl
from jax.experimental.pallas import tpu as pltpu


def _dwconv_kernel(x_ref, w_ref, b_ref, o_ref, xp_ref, *,
                   H, W, K, pad, row_group, act):
    # x_ref : (H, W, Cblk)        input slab, channels on lanes
    # w_ref : (K*K, Cblk)         per-tap lane vectors (VMEM)
    # b_ref : (1, Cblk)           bias lane vector (VMEM)
    # o_ref : (H, W, Cblk)        output slab
    # xp_ref: (H+2p, W+2p, Cblk)  VMEM scratch holding the zero-padded slab
    Hp = H + 2 * pad
    Wp = W + 2 * pad
    Cblk = o_ref.shape[-1]

    # Build the 'same' halo in VMEM: zero only the border strips, then write
    # the interior from the input block.  (No padded HBM copy of x.)
    if pad > 0:
        zrow = jnp.zeros((pad, Wp, Cblk), jnp.float32)
        xp_ref[0:pad, :, :] = zrow
        xp_ref[pad + H:Hp, :, :] = zrow
        zcol = jnp.zeros((Hp, pad, Cblk), jnp.float32)
        xp_ref[:, 0:pad, :] = zcol
        xp_ref[:, pad + W:Wp, :] = zcol
    xp_ref[pad:pad + H, pad:pad + W, :] = x_ref[...].astype(jnp.float32)

    taps = w_ref[...].astype(jnp.float32)   # (K*K, Cblk) lane vectors, loaded once
    bias = b_ref[...].astype(jnp.float32)   # (1, Cblk)

    # Cross-correlation (matches F.conv2d), unrolled over K*K taps and tiled
    # over row groups to bound accumulator vreg pressure.
    for r0 in range(0, H, row_group):
        rows = min(row_group, H - r0)
        acc = jnp.broadcast_to(bias[:, None, :], (rows, W, Cblk))
        for i in range(K):
            for j in range(K):
                t = i * K + j
                tap = taps[t:t + 1, :][:, None, :]                 # (1, 1, Cblk)
                acc = acc + xp_ref[r0 + i:r0 + i + rows, j:j + W, :] * tap
        if act is not None:
            acc = act(acc)
        o_ref[r0:r0 + rows, :, :] = acc.astype(o_ref.dtype)


def hyper_conv2d_depthwise(x, weights, mlp_channels, mlp_kernel, act=None):
    """Pallas implementation of HyperConv2dDepthWise.forward."""
    B, C, H, W = x.shape
    assert C == mlp_channels
    K = mlp_kernel
    # TODO(synk): PyTorch 'same' padding for even K is asymmetric; only odd K supported.
    assert K % 2 == 1, "only odd kernels supported (symmetric 'same' padding)"
    pad = (K - 1) // 2
    Hp, Wp = H + 2 * pad, W + 2 * pad
    BC = B * C
    offset = K * K * C
    out_dtype = x.dtype

    # Hyper-weights -> lane-vector layout (the (b, c) group index on lanes).
    w = weights[:, :offset].reshape(B, C, K * K).astype(jnp.float32)
    w_t = jnp.transpose(w, (2, 0, 1)).reshape(K * K, BC)                 # (K*K, B*C)
    b_t = weights[:, offset:offset + C].astype(jnp.float32).reshape(1, BC)

    # Input -> channel-last (H, W, B*C); layout plumbing done once by XLA.
    x_t = jnp.transpose(x, (2, 3, 0, 1)).reshape(H, W, BC)

    # Channel blocking: block last dim must be a multiple of 128 or full extent.
    LANE = 128
    if BC <= LANE:
        BCp, Cblk = BC, BC
    else:
        BCp = ((BC + LANE - 1) // LANE) * LANE
        Cblk = LANE
        # Grow the lane block while it divides BCp and the f32 slab stays modest
        # (keeps double-buffered in/out within the scoped-VMEM budget on v7x too).
        while BCp % (Cblk * 2) == 0 and H * W * (Cblk * 2) * 4 <= 2 * 1024 * 1024:
            Cblk *= 2
    if BCp != BC:
        x_t = jnp.pad(x_t, ((0, 0), (0, 0), (0, BCp - BC)))
        w_t = jnp.pad(w_t, ((0, 0), (0, BCp - BC)))
        b_t = jnp.pad(b_t, ((0, 0), (0, BCp - BC)))

    # Row-group size: keep the accumulator small, but cap trace unrolling.
    row_group = 8
    while row_group < H and (H + row_group - 1) // row_group > 16:
        row_group *= 2

    kernel = functools.partial(_dwconv_kernel, H=H, W=W, K=K, pad=pad,
                               row_group=row_group, act=act)

    n_cblk = BCp // Cblk
    cost = pl.CostEstimate(
        flops=2 * K * K * B * C * H * W,
        transcendentals=0,
        bytes_accessed=int(x.size * x.dtype.itemsize
                           + B * C * H * W * jnp.dtype(out_dtype).itemsize
                           + weights.size * weights.dtype.itemsize))

    out_t = pl.pallas_call(
        kernel,
        out_shape=jax.ShapeDtypeStruct((H, W, BCp), out_dtype),
        grid=(n_cblk,),
        in_specs=[
            pl.BlockSpec((H, W, Cblk), lambda c: (0, 0, c)),    # input slab
            pl.BlockSpec((K * K, Cblk), lambda c: (0, c)),      # taps (VMEM lane vectors)
            pl.BlockSpec((1, Cblk), lambda c: (0, c)),          # bias  (VMEM lane vector)
        ],
        out_specs=pl.BlockSpec((H, W, Cblk), lambda c: (0, 0, c)),
        scratch_shapes=[pltpu.VMEM((Hp, Wp, Cblk), jnp.float32)],   # padded slab
        compiler_params=pltpu.CompilerParams(
            dimension_semantics=("parallel",),
            vmem_limit_bytes=32 * 1024 * 1024),
        cost_estimate=cost,
    )(x_t, w_t, b_t)

    # Back to NCHW; drop the lane-padding channels.
    out = out_t[:, :, :BC].reshape(H, W, B, C)
    out = jnp.transpose(out, (2, 3, 0, 1))
    return out


def _reference(x, weights, C, K):
    """Pure-JAX reference mirroring the PyTorch forward (grouped conv)."""
    B, _, H, W = x.shape
    offset = K * K * C
    w = weights[:, :offset].reshape(B * C, 1, K, K)
    bias = weights[:, offset:offset + C].reshape(B * C)
    xr = x.reshape(1, B * C, H, W)
    out = jax.lax.conv_general_dilated(
        xr, w, window_strides=(1, 1), padding="SAME",
        dimension_numbers=("NCHW", "OIHW", "NCHW"),
        feature_group_count=B * C)
    out = out + bias.reshape(1, B * C, 1, 1)
    return out.reshape(B, C, H, W)


def _make_inputs(key, B, C, H, W, K):
    kx, kw, kb = jax.random.split(key, 3)
    x = jax.random.normal(kx, (B, C, H, W), dtype=jnp.float32)
    offset = K * K * C
    # Scaled as in ini_weights_: filters ~ N(0,1)*sqrt(6/(K^2+C)), bias ~ N(0,1)*sqrt(1/C)
    w_part = jax.random.normal(kw, (B, offset), dtype=jnp.float32) * jnp.sqrt(6.0 / (K ** 2 + C))
    b_part = jax.random.normal(kb, (B, C), dtype=jnp.float32) * jnp.sqrt(1.0 / C)
    weights = jnp.concatenate([w_part, b_part], axis=1)  # (B, K*K*C + C)
    return x, weights


if __name__ == "__main__":
    key = jax.random.PRNGKey(0)
    k1, k2 = jax.random.split(key)

    # Primary small case (B*C <= 128 -> single full-extent lane block).
    B, C, H, W, K = 2, 4, 16, 16, 3
    x, weights = _make_inputs(k1, B, C, H, W, K)
    out = hyper_conv2d_depthwise(x, weights, mlp_channels=C, mlp_kernel=K, act=None)
    out = jax.block_until_ready(out)
    ref = _reference(x, weights, C, K)
    assert out.shape == (B, C, H, W)
    assert jnp.allclose(out, ref, atol=1e-5, rtol=1e-5), "mismatch vs reference conv"

    # Secondary case exercising the lane-blocked path (B*C > 128, padded to 256).
    B2, C2, H2, W2, K2 = 2, 96, 8, 16, 3
    x2, weights2 = _make_inputs(k2, B2, C2, H2, W2, K2)
    out2 = hyper_conv2d_depthwise(x2, weights2, mlp_channels=C2, mlp_kernel=K2, act=None)
    out2 = jax.block_until_ready(out2)
    ref2 = _reference(x2, weights2, C2, K2)
    assert out2.shape == (B2, C2, H2, W2)
    assert jnp.allclose(out2, ref2, atol=1e-5, rtol=1e-5), "mismatch vs reference conv (blocked)"

    print("KERNEL_OK")
</pallas_src>

<mosaic_0001>
module attributes {stable_mosaic.version = 11 : i64} {
  func.func @_dwconv_kernel(%arg0: i32, %arg1: memref<16x16x8xf32, #tpu.memory_space<vmem>>, %arg2: memref<9x8xf32, #tpu.memory_space<vmem>>, %arg3: memref<1x8xf32, #tpu.memory_space<vmem>>, %arg4: memref<16x16x8xf32, #tpu.memory_space<vmem>>, %arg5: memref<18x18x8xf32, #tpu.memory_space<vmem>>) attributes {dimension_semantics = [#tpu.dimension_semantics<parallel>], iteration_bounds = array<i64: 1>, scalar_prefetch = 0 : i64, scratch_operands = 1 : i64, tpu.core_type = #tpu.core_type<tc>, window_params = [{transform_indices = @transform_0, window_bounds = array<i64: 16, 16, 8>}, {transform_indices = @transform_1, window_bounds = array<i64: 9, 8>}, {transform_indices = @transform_2, window_bounds = array<i64: 1, 8>}, {transform_indices = @transform_3, window_bounds = array<i64: 16, 16, 8>}]} {
    %cst = arith.constant 0.000000e+00 : f32
    %0 = vector.broadcast %cst : f32 to vector<1x18x8xf32>
    %c0 = arith.constant 0 : index
    %c0_0 = arith.constant 0 : index
    %c0_1 = arith.constant 0 : index
    %1 = vector.load %arg5[%c0, %c0_0, %c0_1] : memref<18x18x8xf32, #tpu.memory_space<vmem>>, vector<1x18x8xf32>
    tpu.vector_store %arg5[%c0, %c0_0, %c0_1], %0 {strides = array<i32>} : memref<18x18x8xf32, #tpu.memory_space<vmem>>, vector<1x18x8xf32>,
    %c17 = arith.constant 17 : index
    %c0_2 = arith.constant 0 : index
    %c0_3 = arith.constant 0 : index
    %2 = vector.load %arg5[%c17, %c0_2, %c0_3] : memref<18x18x8xf32, #tpu.memory_space<vmem>>, vector<1x18x8xf32>
    tpu.vector_store %arg5[%c17, %c0_2, %c0_3], %0 {strides = array<i32>} : memref<18x18x8xf32, #tpu.memory_space<vmem>>, vector<1x18x8xf32>,
    %cst_4 = arith.constant 0.000000e+00 : f32
    %3 = vector.broadcast %cst_4 : f32 to vector<18x1x8xf32>
    %c0_5 = arith.constant 0 : index
    %c0_6 = arith.constant 0 : index
    %c0_7 = arith.constant 0 : index
    %4 = vector.load %arg5[%c0_5, %c0_6, %c0_7] : memref<18x18x8xf32, #tpu.memory_space<vmem>>, vector<18x1x8xf32>
    tpu.vector_store %arg5[%c0_5, %c0_6, %c0_7], %3 {strides = array<i32>} : memref<18x18x8xf32, #tpu.memory_space<vmem>>, vector<18x1x8xf32>,
    %c0_8 = arith.constant 0 : index
    %c17_9 = arith.constant 17 : index
    %c0_10 = arith.constant 0 : index
    %5 = vector.load %arg5[%c0_8, %c17_9, %c0_10] : memref<18x18x8xf32, #tpu.memory_space<vmem>>, vector<18x1x8xf32>
    tpu.vector_store %arg5[%c0_8, %c17_9, %c0_10], %3 {strides = array<i32>} : memref<18x18x8xf32, #tpu.memory_space<vmem>>, vector<18x1x8xf32>,
    %c0_11 = arith.constant 0 : index
    %c0_12 = arith.constant 0 : index
    %c0_13 = arith.constant 0 : index
    %6 = vector.load %arg1[%c0_11, %c0_12, %c0_13] : memref<16x16x8xf32, #tpu.memory_space<vmem>>, vector<16x16x8xf32>
    %c1 = arith.constant 1 : index
    %c1_14 = arith.constant 1 : index
    %c0_15 = arith.constant 0 : index
    %7 = vector.load %arg5[%c1, %c1_14, %c0_15] : memref<18x18x8xf32, #tpu.memory_space<vmem>>, vector<16x16x8xf32>
    tpu.vector_store %arg5[%c1, %c1_14, %c0_15], %6 {strides = array<i32>} : memref<18x18x8xf32, #tpu.memory_space<vmem>>, vector<16x16x8xf32>,
    %c0_16 = arith.constant 0 : index
    %c0_17 = arith.constant 0 : index
    %8 = vector.load %arg2[%c0_16, %c0_17] : memref<9x8xf32, #tpu.memory_space<vmem>>, vector<9x8xf32>
    %c0_18 = arith.constant 0 : index
    %c0_19 = arith.constant 0 : index
    %9 = vector.load %arg3[%c0_18, %c0_19] : memref<1x8xf32, #tpu.memory_space<vmem>>, vector<1x8xf32>
    %10 = vector.shape_cast %9 : vector<1x8xf32> to vector<1x1x8xf32>
    %11 = vector.shape_cast %10 : vector<1x1x8xf32> to vector<1x1x8xf32>
    %12 = vector.broadcast %11 : vector<1x1x8xf32> to vector<8x16x8xf32>
    %13 = vector.extract_strided_slice %8 {offsets = [0, 0], sizes = [1, 8], strides = [1, 1]} : vector<9x8xf32> to vector<1x8xf32>
    %14 = vector.shape_cast %13 : vector<1x8xf32> to vector<1x1x8xf32>
    %c0_20 = arith.constant 0 : index
    %c0_21 = arith.constant 0 : index
    %c0_22 = arith.constant 0 : index
    %15 = vector.load %arg5[%c0_20, %c0_21, %c0_22] : memref<18x18x8xf32, #tpu.memory_space<vmem>>, vector<8x16x8xf32>
    %16 = vector.broadcast %14 : vector<1x1x8xf32> to vector<8x16x8xf32>
    %17 = arith.mulf %15, %16 : vector<8x16x8xf32>
    %18 = arith.addf %12, %17 : vector<8x16x8xf32>
    %19 = vector.extract_strided_slice %8 {offsets = [1, 0], sizes = [1, 8], strides = [1, 1]} : vector<9x8xf32> to vector<1x8xf32>
    %20 = vector.shape_cast %19 : vector<1x8xf32> to vector<1x1x8xf32>
    %c0_23 = arith.constant 0 : index
    %c1_24 = arith.constant 1 : index
    %c0_25 = arith.constant 0 : index
    %21 = vector.load %arg5[%c0_23, %c1_24, %c0_25] : memref<18x18x8xf32, #tpu.memory_space<vmem>>, vector<8x16x8xf32>
    %22 = vector.broadcast %20 : vector<1x1x8xf32> to vector<8x16x8xf32>
    %23 = arith.mulf %21, %22 : vector<8x16x8xf32>
    %24 = arith.addf %18, %23 : vector<8x16x8xf32>
    %25 = vector.extract_strided_slice %8 {offsets = [2, 0], sizes = [1, 8], strides = [1, 1]} : vector<9x8xf32> to vector<1x8xf32>
    %26 = vector.shape_cast %25 : vector<1x8xf32> to vector<1x1x8xf32>
    %c0_26 = arith.constant 0 : index
    %c2 = arith.constant 2 : index
    %c0_27 = arith.constant 0 : index
    %27 = vector.load %arg5[%c0_26, %c2, %c0_27] : memref<18x18x8xf32, #tpu.memory_space<vmem>>, vector<8x16x8xf32>
    %28 = vector.broadcast %26 : vector<1x1x8xf32> to vector<8x16x8xf32>
    %29 = arith.mulf %27, %28 : vector<8x16x8xf32>
    %30 = arith.addf %24, %29 : vector<8x16x8xf32>
    %31 = vector.extract_strided_slice %8 {offsets = [3, 0], sizes = [1, 8], strides = [1, 1]} : vector<9x8xf32> to vector<1x8xf32>
    %32 = vector.shape_cast %31 : vector<1x8xf32> to vector<1x1x8xf32>
    %c1_28 = arith.constant 1 : index
    %c0_29 = arith.constant 0 : index
    %c0_30 = arith.constant 0 : index
    %33 = vector.load %arg5[%c1_28, %c0_29, %c0_30] : memref<18x18x8xf32, #tpu.memory_space<vmem>>, vector<8x16x8xf32>
    %34 = vector.broadcast %32 : vector<1x1x8xf32> to vector<8x16x8xf32>
    %35 = arith.mulf %33, %34 : vector<8x16x8xf32>
    %36 = arith.addf %30, %35 : vector<8x16x8xf32>
    %37 = vector.extract_strided_slice %8 {offsets = [4, 0], sizes = [1, 8], strides = [1, 1]} : vector<9x8xf32> to vector<1x8xf32>
    %38 = vector.shape_cast %37 : vector<1x8xf32> to vector<1x1x8xf32>
    %c1_31 = arith.constant 1 : index
    %c1_32 = arith.constant 1 : index
    %c0_33 = arith.constant 0 : index
    %39 = vector.load %arg5[%c1_31, %c1_32, %c0_33] : memref<18x18x8xf32, #tpu.memory_space<vmem>>, vector<8x16x8xf32>
    %40 = vector.broadcast %38 : vector<1x1x8xf32> to vector<8x16x8xf32>
    %41 = arith.mulf %39, %40 : vector<8x16x8xf32>
    %42 = arith.addf %36, %41 : vector<8x16x8xf32>
    %43 = vector.extract_strided_slice %8 {offsets = [5, 0], sizes = [1, 8], strides = [1, 1]} : vector<9x8xf32> to vector<1x8xf32>
    %44 = vector.shape_cast %43 : vector<1x8xf32> to vector<1x1x8xf32>
    %c1_34 = arith.constant 1 : index
    %c2_35 = arith.constant 2 : index
    %c0_36 = arith.constant 0 : index
    %45 = vector.load %arg5[%c1_34, %c2_35, %c0_36] : memref<18x18x8xf32, #tpu.memory_space<vmem>>, vector<8x16x8xf32>
    %46 = vector.broadcast %44 : vector<1x1x8xf32> to vector<8x16x8xf32>
    %47 = arith.mulf %45, %46 : vector<8x16x8xf32>
    %48 = arith.addf %42, %47 : vector<8x16x8xf32>
    %49 = vector.extract_strided_slice %8 {offsets = [6, 0], sizes = [1, 8], strides = [1, 1]} : vector<9x8xf32> to vector<1x8xf32>
    %50 = vector.shape_cast %49 : vector<1x8xf32> to vector<1x1x8xf32>
    %c2_37 = arith.constant 2 : index
    %c0_38 = arith.constant 0 : index
    %c0_39 = arith.constant 0 : index
    %51 = vector.load %arg5[%c2_37, %c0_38, %c0_39] : memref<18x18x8xf32, #tpu.memory_space<vmem>>, vector<8x16x8xf32>
    %52 = vector.broadcast %50 : vector<1x1x8xf32> to vector<8x16x8xf32>
    %53 = arith.mulf %51, %52 : vector<8x16x8xf32>
    %54 = arith.addf %48, %53 : vector<8x16x8xf32>
    %55 = vector.extract_strided_slice %8 {offsets = [7, 0], sizes = [1, 8], strides = [1, 1]} : vector<9x8xf32> to vector<1x8xf32>
    %56 = vector.shape_cast %55 : vector<1x8xf32> to vector<1x1x8xf32>
    %c2_40 = arith.constant 2 : index
    %c1_41 = arith.constant 1 : index
    %c0_42 = arith.constant 0 : index
    %57 = vector.load %arg5[%c2_40, %c1_41, %c0_42] : memref<18x18x8xf32, #tpu.memory_space<vmem>>, vector<8x16x8xf32>
    %58 = vector.broadcast %56 : vector<1x1x8xf32> to vector<8x16x8xf32>
    %59 = arith.mulf %57, %58 : vector<8x16x8xf32>
    %60 = arith.addf %54, %59 : vector<8x16x8xf32>
    %61 = vector.extract_strided_slice %8 {offsets = [8, 0], sizes = [1, 8], strides = [1, 1]} : vector<9x8xf32> to vector<1x8xf32>
    %62 = vector.shape_cast %61 : vector<1x8xf32> to vector<1x1x8xf32>
    %c2_43 = arith.constant 2 : index
    %c2_44 = arith.constant 2 : index
    %c0_45 = arith.constant 0 : index
    %63 = vector.load %arg5[%c2_43, %c2_44, %c0_45] : memref<18x18x8xf32, #tpu.memory_space<vmem>>, vector<8x16x8xf32>
    %64 = vector.broadcast %62 : vector<1x1x8xf32> to vector<8x16x8xf32>
    %65 = arith.mulf %63, %64 : vector<8x16x8xf32>
    %66 = arith.addf %60, %65 : vector<8x16x8xf32>
    %c0_46 = arith.constant 0 : index
    %c0_47 = arith.constant 0 : index
    %c0_48 = arith.constant 0 : index
    %67 = vector.load %arg4[%c0_46, %c0_47, %c0_48] : memref<16x16x8xf32, #tpu.memory_space<vmem>>, vector<8x16x8xf32>
    tpu.vector_store %arg4[%c0_46, %c0_47, %c0_48], %66 {strides = array<i32>} : memref<16x16x8xf32, #tpu.memory_space<vmem>>, vector<8x16x8xf32>,
    %68 = vector.shape_cast %9 : vector<1x8xf32> to vector<1x1x8xf32>
    %69 = vector.shape_cast %68 : vector<1x1x8xf32> to vector<1x1x8xf32>
    %70 = vector.broadcast %69 : vector<1x1x8xf32> to vector<8x16x8xf32>
    %71 = vector.extract_strided_slice %8 {offsets = [0, 0], sizes = [1, 8], strides = [1, 1]} : vector<9x8xf32> to vector<1x8xf32>
    %72 = vector.shape_cast %71 : vector<1x8xf32> to vector<1x1x8xf32>
    %c8 = arith.constant 8 : index
    %c0_49 = arith.constant 0 : index
    %c0_50 = arith.constant 0 : index
    %73 = vector.load %arg5[%c8, %c0_49, %c0_50] : memref<18x18x8xf32, #tpu.memory_space<vmem>>, vector<8x16x8xf32>
    %74 = vector.broadcast %72 : vector<1x1x8xf32> to vector<8x16x8xf32>
    %75 = arith.mulf %73, %74 : vector<8x16x8xf32>
    %76 = arith.addf %70, %75 : vector<8x16x8xf32>
    %77 = vector.extract_strided_slice %8 {offsets = [1, 0], sizes = [1, 8], strides = [1, 1]} : vector<9x8xf32> to vector<1x8xf32>
    %78 = vector.shape_cast %77 : vector<1x8xf32> to vector<1x1x8xf32>
    %c8_51 = arith.constant 8 : index
    %c1_52 = arith.constant 1 : index
    %c0_53 = arith.constant 0 : index
    %79 = vector.load %arg5[%c8_51, %c1_52, %c0_53] : memref<18x18x8xf32, #tpu.memory_space<vmem>>, vector<8x16x8xf32>
    %80 = vector.broadcast %78 : vector<1x1x8xf32> to vector<8x16x8xf32>
    %81 = arith.mulf %79, %80 : vector<8x16x8xf32>
    %82 = arith.addf %76, %81 : vector<8x16x8xf32>
    %83 = vector.extract_strided_slice %8 {offsets = [2, 0], sizes = [1, 8], strides = [1, 1]} : vector<9x8xf32> to vector<1x8xf32>
    %84 = vector.shape_cast %83 : vector<1x8xf32> to vector<1x1x8xf32>
    %c8_54 = arith.constant 8 : index
    %c2_55 = arith.constant 2 : index
    %c0_56 = arith.constant 0 : index
    %85 = vector.load %arg5[%c8_54, %c2_55, %c0_56] : memref<18x18x8xf32, #tpu.memory_space<vmem>>, vector<8x16x8xf32>
    %86 = vector.broadcast %84 : vector<1x1x8xf32> to vector<8x16x8xf32>
    %87 = arith.mulf %85, %86 : vector<8x16x8xf32>
    %88 = arith.addf %82, %87 : vector<8x16x8xf32>
    %89 = vector.extract_strided_slice %8 {offsets = [3, 0], sizes = [1, 8], strides = [1, 1]} : vector<9x8xf32> to vector<1x8xf32>
    %90 = vector.shape_cast %89 : vector<1x8xf32> to vector<1x1x8xf32>
    %c9 = arith.constant 9 : index
    %c0_57 = arith.constant 0 : index
    %c0_58 = arith.constant 0 : index
    %91 = vector.load %arg5[%c9, %c0_57, %c0_58] : memref<18x18x8xf32, #tpu.memory_space<vmem>>, vector<8x16x8xf32>
    %92 = vector.broadcast %90 : vector<1x1x8xf32> to vector<8x16x8xf32>
    %93 = arith.mulf %91, %92 : vector<8x16x8xf32>
    %94 = arith.addf %88, %93 : vector<8x16x8xf32>
    %95 = vector.extract_strided_slice %8 {offsets = [4, 0], sizes = [1, 8], strides = [1, 1]} : vector<9x8xf32> to vector<1x8xf32>
    %96 = vector.shape_cast %95 : vector<1x8xf32> to vector<1x1x8xf32>
    %c9_59 = arith.constant 9 : index
    %c1_60 = arith.constant 1 : index
    %c0_61 = arith.constant 0 : index
    %97 = vector.load %arg5[%c9_59, %c1_60, %c0_61] : memref<18x18x8xf32, #tpu.memory_space<vmem>>, vector<8x16x8xf32>
    %98 = vector.broadcast %96 : vector<1x1x8xf32> to vector<8x16x8xf32>
    %99 = arith.mulf %97, %98 : vector<8x16x8xf32>
    %100 = arith.addf %94, %99 : vector<8x16x8xf32>
    %101 = vector.extract_strided_slice %8 {offsets = [5, 0], sizes = [1, 8], strides = [1, 1]} : vector<9x8xf32> to vector<1x8xf32>
    %102 = vector.shape_cast %101 : vector<1x8xf32> to vector<1x1x8xf32>
    %c9_62 = arith.constant 9 : index
    %c2_63 = arith.constant 2 : index
    %c0_64 = arith.constant 0 : index
    %103 = vector.load %arg5[%c9_62, %c2_63, %c0_64] : memref<18x18x8xf32, #tpu.memory_space<vmem>>, vector<8x16x8xf32>
    %104 = vector.broadcast %102 : vector<1x1x8xf32> to vector<8x16x8xf32>
    %105 = arith.mulf %103, %104 : vector<8x16x8xf32>
    %106 = arith.addf %100, %105 : vector<8x16x8xf32>
    %107 = vector.extract_strided_slice %8 {offsets = [6, 0], sizes = [1, 8], strides = [1, 1]} : vector<9x8xf32> to vector<1x8xf32>
    %108 = vector.shape_cast %107 : vector<1x8xf32> to vector<1x1x8xf32>
    %c10 = arith.constant 10 : index
    %c0_65 = arith.constant 0 : index
    %c0_66 = arith.constant 0 : index
    %109 = vector.load %arg5[%c10, %c0_65, %c0_66] : memref<18x18x8xf32, #tpu.memory_space<vmem>>, vector<8x16x8xf32>
    %110 = vector.broadcast %108 : vector<1x1x8xf32> to vector<8x16x8xf32>
    %111 = arith.mulf %109, %110 : vector<8x16x8xf32>
    %112 = arith.addf %106, %111 : vector<8x16x8xf32>
    %113 = vector.extract_strided_slice %8 {offsets = [7, 0], sizes = [1, 8], strides = [1, 1]} : vector<9x8xf32> to vector<1x8xf32>
    %114 = vector.shape_cast %113 : vector<1x8xf32> to vector<1x1x8xf32>
    %c10_67 = arith.constant 10 : index
    %c1_68 = arith.constant 1 : index
    %c0_69 = arith.constant 0 : index
    %115 = vector.load %arg5[%c10_67, %c1_68, %c0_69] : memref<18x18x8xf32, #tpu.memory_space<vmem>>, vector<8x16x8xf32>
    %116 = vector.broadcast %114 : vector<1x1x8xf32> to vector<8x16x8xf32>
    %117 = arith.mulf %115, %116 : vector<8x16x8xf32>
    %118 = arith.addf %112, %117 : vector<8x16x8xf32>
    %119 = vector.extract_strided_slice %8 {offsets = [8, 0], sizes = [1, 8], strides = [1, 1]} : vector<9x8xf32> to vector<1x8xf32>
    %120 = vector.shape_cast %119 : vector<1x8xf32> to vector<1x1x8xf32>
    %c10_70 = arith.constant 10 : index
    %c2_71 = arith.constant 2 : index
    %c0_72 = arith.constant 0 : index
    %121 = vector.load %arg5[%c10_70, %c2_71, %c0_72] : memref<18x18x8xf32, #tpu.memory_space<vmem>>, vector<8x16x8xf32>
    %122 = vector.broadcast %120 : vector<1x1x8xf32> to vector<8x16x8xf32>
    %123 = arith.mulf %121, %122 : vector<8x16x8xf32>
    %124 = arith.addf %118, %123 : vector<8x16x8xf32>
    %c8_73 = arith.constant 8 : index
    %c0_74 = arith.constant 0 : index
    %c0_75 = arith.constant 0 : index
    %125 = vector.load %arg4[%c8_73, %c0_74, %c0_75] : memref<16x16x8xf32, #tpu.memory_space<vmem>>, vector<8x16x8xf32>
    tpu.vector_store %arg4[%c8_73, %c0_74, %c0_75], %124 {strides = array<i32>} : memref<16x16x8xf32, #tpu.memory_space<vmem>>, vector<8x16x8xf32>,
    return
  }
  func.func @transform_0(%arg0: i32) -> (i32, i32, i32) {
    %c0_i32 = arith.constant 0 : i32
    %c0_i32_0 = arith.constant 0 : i32
    %c0_i32_1 = arith.constant 0 : i32
    return %c0_i32, %c0_i32_0, %arg0 : i32, i32, i32
  }
  func.func @transform_1(%arg0: i32) -> (i32, i32) {
    %c0_i32 = arith.constant 0 : i32
    %c0_i32_0 = arith.constant 0 : i32
    return %c0_i32, %arg0 : i32, i32
  }
  func.func @transform_2(%arg0: i32) -> (i32, i32) {
    %c0_i32 = arith.constant 0 : i32
    %c0_i32_0 = arith.constant 0 : i32
    return %c0_i32, %arg0 : i32, i32
  }
  func.func @transform_3(%arg0: i32) -> (i32, i32, i32) {
    %c0_i32 = arith.constant 0 : i32
    %c0_i32_0 = arith.constant 0 : i32
    %c0_i32_1 = arith.constant 0 : i32
    return %c0_i32, %c0_i32_0, %arg0 : i32, i32, i32
  }
}

</mosaic_0001>

<llo_original>
// kernel: tpu_custom_call.1
$region0: #{tpu_custom_call.1}
  #allocation0 [shape = 'u32[]', space=smem, size = 0x4, offset = 0x4, fixed_abs, tag = 'smem constant byte address 0x4 - core index']
  #allocation1 [shape = 'u32[144,128]{1,0:T(1,128)}', space=vmem, size = 0x12000, scoped, tag = 'internal scratch']
  #allocation2 [shape = 'f32[18,18,8]{2,1,0:T(8,128)}', space=vmem, size = 0x36000, scoped, tag = 'scratch operand']
  %s0 = inlined_call_operand.vmem [shape: f32[16,16,8], index: 0, kind: input, shape index: {}]
  %s1 = inlined_call_operand.vmem [shape: f32[9,8], index: 1, kind: input, shape index: {}]
  %s2 = inlined_call_operand.vmem [shape: f32[1,8], index: 2, kind: input, shape index: {}]
  %s3 = inlined_call_operand.vmem [shape: f32[16,16,8], index: 3, kind: output, shape index: {}]
  %s4 = sld [smem:[#allocation0]]
  $region22: #{tpu_custom_call.1} parent=0
    _
  %s6 = ssub.s32 1, %s4
  %s7 = scalar_select 0, %s6, %s4
  // Predicated region
  $region2: #{tpu_custom_call.1} parent=0 // pred_check
    _
  $region3: #{tpu_custom_call.1} parent=0 // pred_check_branch
    %9 = sbr.rel (0) target = $region5
  $region4: #{tpu_custom_call.1} parent=0 // pred_region
    _
  $region5: #{tpu_custom_call.1} parent=0 // pred_fallthru
    _
  // Predicated region
  $region6: #{tpu_custom_call.1} parent=0 // pred_check
    _
  $region7: #{tpu_custom_call.1} parent=0 // pred_check_branch
    %11 = sbr.rel (0) target = $region9
  $region8: #{tpu_custom_call.1} parent=0 // pred_region
    _
  $region9: #{tpu_custom_call.1} parent=0 // pred_fallthru
    _
  // Predicated region
  $region10: #{tpu_custom_call.1} parent=0 // pred_check
    _
  $region11: #{tpu_custom_call.1} parent=0 // pred_check_branch
    %13 = sbr.rel (0) target = $region13
  $region12: #{tpu_custom_call.1} parent=0 // pred_region
    _
  $region13: #{tpu_custom_call.1} parent=0 // pred_fallthru
    _
  %vm14 = vcmask 64512
  %15 = vst.msk [vmem:[#allocation2] sm:$0xff] %vm14, 0.0
  %16 = vst.msk [vmem:[#allocation2 + $0x8] sm:$0xff] %vm14, 0.0
  %vm17 = vcmask 58368
  %18 = vst.msk [vmem:[#allocation2 + $0x10] sm:$0x3] %vm17, 0.0
  %s19 = scalar_lea.vmem [#allocation2], 408
  %20 = vst.msk [vmem:[%s19] sm:$0xff] %vm14, 0.0
  %21 = vst.msk [vmem:[%s19 + $0x8] sm:$0xff] %vm14, 0.0
  %22 = vst.msk [vmem:[%s19 + $0x10] sm:$0x3] %vm17, 0.0
  %vm23 = vcmask 57344
  %24 = vst.msk [vmem:[#allocation2] sm:$0x1] %vm23, 0.0
  %25 = vst.msk [vmem:[#allocation2 + $0x18] sm:$0x1] %vm23, 0.0
  %26 = vst.msk [vmem:[#allocation2 + $0x30] sm:$0x1] %vm23, 0.0
  %27 = vst.msk [vmem:[#allocation2 + $0x48] sm:$0x1] %vm23, 0.0
  %28 = vst.msk [vmem:[#allocation2 + $0x60] sm:$0x1] %vm23, 0.0
  %29 = vst.msk [vmem:[#allocation2 + $0x78] sm:$0x1] %vm23, 0.0
  %30 = vst.msk [vmem:[#allocation2 + $0x90] sm:$0x1] %vm23, 0.0
  %31 = vst.msk [vmem:[#allocation2 + $0xa8] sm:$0x1] %vm23, 0.0
  %32 = vst.msk [vmem:[#allocation2 + $0xc0] sm:$0x1] %vm23, 0.0
  %33 = vst.msk [vmem:[#allocation2 + $0xd8] sm:$0x1] %vm23, 0.0
  %34 = vst.msk [vmem:[#allocation2 + $0xf0] sm:$0x1] %vm23, 0.0
  %35 = vst.msk [vmem:[#allocation2 + $0x108] sm:$0x1] %vm23, 0.0
  %36 = vst.msk [vmem:[#allocation2 + $0x120] sm:$0x1] %vm23, 0.0
  %37 = vst.msk [vmem:[#allocation2 + $0x138] sm:$0x1] %vm23, 0.0
  %38 = vst.msk [vmem:[#allocation2 + $0x150] sm:$0x1] %vm23, 0.0
  %39 = vst.msk [vmem:[#allocation2 + $0x168] sm:$0x1] %vm23, 0.0
  %40 = vst.msk [vmem:[#allocation2 + $0x180] sm:$0x1] %vm23, 0.0
  %41 = vst.msk [vmem:[#allocation2 + $0x198] sm:$0x1] %vm23, 0.0
  %42 = vst.msk [vmem:[#allocation2 + $0x11] sm:$0x1] %vm23, 0.0
  %43 = vst.msk [vmem:[#allocation2 + $0x29] sm:$0x1] %vm23, 0.0
  %44 = vst.msk [vmem:[#allocation2 + $0x41] sm:$0x1] %vm23, 0.0
  %45 = vst.msk [vmem:[#allocation2 + $0x59] sm:$0x1] %vm23, 0.0
  %46 = vst.msk [vmem:[#allocation2 + $0x71] sm:$0x1] %vm23, 0.0
  %47 = vst.msk [vmem:[#allocation2 + $0x89] sm:$0x1] %vm23, 0.0
  %48 = vst.msk [vmem:[#allocation2 + $0xa1] sm:$0x1] %vm23, 0.0
  %49 = vst.msk [vmem:[#allocation2 + $0xb9] sm:$0x1] %vm23, 0.0
  %50 = vst.msk [vmem:[#allocation2 + $0xd1] sm:$0x1] %vm23, 0.0
  %51 = vst.msk [vmem:[#allocation2 + $0xe9] sm:$0x1] %vm23, 0.0
  %52 = vst.msk [vmem:[#allocation2 + $0x101] sm:$0x1] %vm23, 0.0
  %53 = vst.msk [vmem:[#allocation2 + $0x119] sm:$0x1] %vm23, 0.0
  %54 = vst.msk [vmem:[#allocation2 + $0x131] sm:$0x1] %vm23, 0.0
  %55 = vst.msk [vmem:[#allocation2 + $0x149] sm:$0x1] %vm23, 0.0
  %56 = vst.msk [vmem:[#allocation2 + $0x161] sm:$0x1] %vm23, 0.0
  %57 = vst.msk [vmem:[#allocation2 + $0x179] sm:$0x1] %vm23, 0.0
  %58 = vst.msk [vmem:[#allocation2 + $0x191] sm:$0x1] %vm23, 0.0
  %59 = vst.msk [vmem:[#allocation2 + $0x1a9] sm:$0x1] %vm23, 0.0
  %v60 = vld [vmem:[%s0] sm:$0xff]
  %v61 = vld [vmem:[%s0 + $0x8] sm:$0xff]
  %v62 = vld [vmem:[%s0 + $0x10] sm:$0xff]
  %v63 = vld [vmem:[%s0 + $0x18] sm:$0xff]
  %v64 = vld [vmem:[%s0 + $0x20] sm:$0xff]
  %v65 = vld [vmem:[%s0 + $0x28] sm:$0xff]
  %v66 = vld [vmem:[%s0 + $0x30] sm:$0xff]
  %v67 = vld [vmem:[%s0 + $0x38] sm:$0xff]
  %v68 = vld [vmem:[%s0 + $0x40] sm:$0xff]
  %v69 = vld [vmem:[%s0 + $0x48] sm:$0xff]
  %v70 = vld [vmem:[%s0 + $0x50] sm:$0xff]
  %v71 = vld [vmem:[%s0 + $0x58] sm:$0xff]
  %v72 = vld [vmem:[%s0 + $0x60] sm:$0xff]
  %v73 = vld [vmem:[%s0 + $0x68] sm:$0xff]
  %v74 = vld [vmem:[%s0 + $0x70] sm:$0xff]
  %v75 = vld [vmem:[%s0 + $0x78] sm:$0xff]
  %v76 = vld [vmem:[%s0 + $0x80] sm:$0xff]
  %v77 = vld [vmem:[%s0 + $0x88] sm:$0xff]
  %v78 = vld [vmem:[%s0 + $0x90] sm:$0xff]
  %v79 = vld [vmem:[%s0 + $0x98] sm:$0xff]
  %v80 = vld [vmem:[%s0 + $0xa0] sm:$0xff]
  %v81 = vld [vmem:[%s0 + $0xa8] sm:$0xff]
  %v82 = vld [vmem:[%s0 + $0xb0] sm:$0xff]
  %v83 = vld [vmem:[%s0 + $0xb8] sm:$0xff]
  %v84 = vld [vmem:[%s0 + $0xc0] sm:$0xff]
  %v85 = vld [vmem:[%s0 + $0xc8] sm:$0xff]
  %v86 = vld [vmem:[%s0 + $0xd0] sm:$0xff]
  %v87 = vld [vmem:[%s0 + $0xd8] sm:$0xff]
  %v88 = vld [vmem:[%s0 + $0xe0] sm:$0xff]
  %v89 = vld [vmem:[%s0 + $0xe8] sm:$0xff]
  %v90 = vld [vmem:[%s0 + $0xf0] sm:$0xff]
  %v91 = vld [vmem:[%s0 + $0xf8] sm:$0xff]
  %s92 = scalar_lea.vmem [#allocation2], 24
  %93 = vst.msk [vmem:[%s92 + $0x1] sm:$0xff] %vm14, %v60
  %94 = vst.msk [vmem:[%s92 + $0x9] sm:$0xff] %vm14, %v61
  %95 = vst.msk [vmem:[%s92 + $0x19] sm:$0xff] %vm14, %v62
  %96 = vst.msk [vmem:[%s92 + $0x21] sm:$0xff] %vm14, %v63
  %97 = vst.msk [vmem:[%s92 + $0x31] sm:$0xff] %vm14, %v64
  %98 = vst.msk [vmem:[%s92 + $0x39] sm:$0xff] %vm14, %v65
  %99 = vst.msk [vmem:[%s92 + $0x49] sm:$0xff] %vm14, %v66
  %100 = vst.msk [vmem:[%s92 + $0x51] sm:$0xff] %vm14, %v67
  %101 = vst.msk [vmem:[%s92 + $0x61] sm:$0xff] %vm14, %v68
  %102 = vst.msk [vmem:[%s92 + $0x69] sm:$0xff] %vm14, %v69
  %103 = vst.msk [vmem:[%s92 + $0x79] sm:$0xff] %vm14, %v70
  %104 = vst.msk [vmem:[%s92 + $0x81] sm:$0xff] %vm14, %v71
  %105 = vst.msk [vmem:[%s92 + $0x91] sm:$0xff] %vm14, %v72
  %106 = vst.msk [vmem:[%s92 + $0x99] sm:$0xff] %vm14, %v73
  %107 = vst.msk [vmem:[%s92 + $0xa9] sm:$0xff] %vm14, %v74
  %108 = vst.msk [vmem:[%s92 + $0xb1] sm:$0xff] %vm14, %v75
  %109 = vst.msk [vmem:[%s92 + $0xc1] sm:$0xff] %vm14, %v76
  %110 = vst.msk [vmem:[%s92 + $0xc9] sm:$0xff] %vm14, %v77
  %111 = vst.msk [vmem:[%s92 + $0xd9] sm:$0xff] %vm14, %v78
  %112 = vst.msk [vmem:[%s92 + $0xe1] sm:$0xff] %vm14, %v79
  %113 = vst.msk [vmem:[%s92 + $0xf1] sm:$0xff] %vm14, %v80
  %114 = vst.msk [vmem:[%s92 + $0xf9] sm:$0xff] %vm14, %v81
  %115 = vst.msk [vmem:[%s92 + $0x109] sm:$0xff] %vm14, %v82
  %116 = vst.msk [vmem:[%s92 + $0x111] sm:$0xff] %vm14, %v83
  %117 = vst.msk [vmem:[%s92 + $0x121] sm:$0xff] %vm14, %v84
  %118 = vst.msk [vmem:[%s92 + $0x129] sm:$0xff] %vm14, %v85
  %119 = vst.msk [vmem:[%s92 + $0x139] sm:$0xff] %vm14, %v86
  %120 = vst.msk [vmem:[%s92 + $0x141] sm:$0xff] %vm14, %v87
  %121 = vst.msk [vmem:[%s92 + $0x151] sm:$0xff] %vm14, %v88
  %122 = vst.msk [vmem:[%s92 + $0x159] sm:$0xff] %vm14, %v89
  %123 = vst.msk [vmem:[%s92 + $0x169] sm:$0xff] %vm14, %v90
  %124 = vst.msk [vmem:[%s92 + $0x171] sm:$0xff] %vm14, %v91
  %v125 = vld [vmem:[%s1] sm:$0xff]
  %v126 = vld [vmem:[%s1 + $0x8] sm:$0x1]
  %v127 = vld [vmem:[%s2] sm:$0x1]
  %v129 = vlaneseq
  %v130 = vshrl.u32 %v129, 7
  %v131 = vsub.s32 0, %v130
  %v132 = vrot.slane %v127, %v131
  %v134 = vld [vmem:[#allocation2] sm:$0xff]
  %v135 = vld [vmem:[#allocation2 + $0x8] sm:$0xff]
  %v136 = vld [vmem:[#allocation2 + $0x18] sm:$0xff]
  %v137 = vld [vmem:[#allocation2 + $0x20] sm:$0xff]
  %v138 = vld [vmem:[#allocation2 + $0x30] sm:$0xff]
  %v139 = vld [vmem:[#allocation2 + $0x38] sm:$0xff]
  %v140 = vld [vmem:[#allocation2 + $0x48] sm:$0xff]
  %v141 = vld [vmem:[#allocation2 + $0x50] sm:$0xff]
  %v142 = vld [vmem:[#allocation2 + $0x60] sm:$0xff]
  %v143 = vld [vmem:[#allocation2 + $0x68] sm:$0xff]
  %v144 = vld [vmem:[#allocation2 + $0x78] sm:$0xff]
  %v145 = vld [vmem:[#allocation2 + $0x80] sm:$0xff]
  %v146 = vld [vmem:[#allocation2 + $0x90] sm:$0xff]
  %v147 = vld [vmem:[#allocation2 + $0x98] sm:$0xff]
  %v148 = vld [vmem:[#allocation2 + $0xa8] sm:$0xff]
  %v149 = vld [vmem:[#allocation2 + $0xb0] sm:$0xff]
  %v150 = vlaneseq
  %v151 = vshrl.u32 %v150, 7
  %v152 = vsub.s32 0, %v151
  %v153 = vrot.slane %v125, %v152
  %v154 = vmul.f32 %v134, %v153
  %v155 = vmul.f32 %v135, %v153
  %v156 = vmul.f32 %v136, %v153
  %v157 = vmul.f32 %v137, %v153
  %v158 = vmul.f32 %v138, %v153
  %v159 = vmul.f32 %v139, %v153
  %v160 = vmul.f32 %v140, %v153
  %v161 = vmul.f32 %v141, %v153
  %v162 = vmul.f32 %v142, %v153
  %v163 = vmul.f32 %v143, %v153
  %v164 = vmul.f32 %v144, %v153
  %v165 = vmul.f32 %v145, %v153
  %v166 = vmul.f32 %v146, %v153
  %v167 = vmul.f32 %v147, %v153
  %v168 = vmul.f32 %v148, %v153
  %v169 = vmul.f32 %v149, %v153
  %v170 = vadd.f32 %v132, %v154
  %v171 = vadd.f32 %v132, %v155
  %v172 = vadd.f32 %v132, %v156
  %v173 = vadd.f32 %v132, %v157
  %v174 = vadd.f32 %v132, %v158
  %v175 = vadd.f32 %v132, %v159
  %v176 = vadd.f32 %v132, %v160
  %v177 = vadd.f32 %v132, %v161
  %v178 = vadd.f32 %v132, %v162
  %v179 = vadd.f32 %v132, %v163
  %v180 = vadd.f32 %v132, %v164
  %v181 = vadd.f32 %v132, %v165
  %v182 = vadd.f32 %v132, %v166
  %v183 = vadd.f32 %v132, %v167
  %v184 = vadd.f32 %v132, %v168
  %v185 = vadd.f32 %v132, %v169
  %v186 = vld [vmem:[#allocation2 + $0x1] sm:$0xff]
  %v187 = vld [vmem:[#allocation2 + $0x9] sm:$0xff]
  %v188 = vld [vmem:[#allocation2 + $0x19] sm:$0xff]
  %v189 = vld [vmem:[#allocation2 + $0x21] sm:$0xff]
  %v190 = vld [vmem:[#allocation2 + $0x31] sm:$0xff]
  %v191 = vld [vmem:[#allocation2 + $0x39] sm:$0xff]
  %v192 = vld [vmem:[#allocation2 + $0x49] sm:$0xff]
  %v193 = vld [vmem:[#allocation2 + $0x51] sm:$0xff]
  %v194 = vld [vmem:[#allocation2 + $0x61] sm:$0xff]
  %v195 = vld [vmem:[#allocation2 + $0x69] sm:$0xff]
  %v196 = vld [vmem:[#allocation2 + $0x79] sm:$0xff]
  %v197 = vld [vmem:[#allocation2 + $0x81] sm:$0xff]
  %v198 = vld [vmem:[#allocation2 + $0x91] sm:$0xff]
  %v199 = vld [vmem:[#allocation2 + $0x99] sm:$0xff]
  %v200 = vld [vmem:[#allocation2 + $0xa9] sm:$0xff]
  %v201 = vld [vmem:[#allocation2 + $0xb1] sm:$0xff]
  %v202 = vlaneseq
  %v203 = vshrl.u32 %v202, 7
  %v204 = vsub.s32 1, %v203
  %v205 = vrot.slane %v125, %v204
  %v206 = vmul.f32 %v186, %v205
  %v207 = vmul.f32 %v187, %v205
  %v208 = vmul.f32 %v188, %v205
  %v209 = vmul.f32 %v189, %v205
  %v210 = vmul.f32 %v190, %v205
  %v211 = vmul.f32 %v191, %v205
  %v212 = vmul.f32 %v192, %v205
  %v213 = vmul.f32 %v193, %v205
  %v214 = vmul.f32 %v194, %v205
  %v215 = vmul.f32 %v195, %v205
  %v216 = vmul.f32 %v196, %v205
  %v217 = vmul.f32 %v197, %v205
  %v218 = vmul.f32 %v198, %v205
  %v219 = vmul.f32 %v199, %v205
  %v220 = vmul.f32 %v200, %v205
  %v221 = vmul.f32 %v201, %v205
  %v222 = vadd.f32 %v170, %v206
  %v223 = vadd.f32 %v171, %v207
  %v224 = vadd.f32 %v172, %v208
  %v225 = vadd.f32 %v173, %v209
  %v226 = vadd.f32 %v174, %v210
  %v227 = vadd.f32 %v175, %v211
  %v228 = vadd.f32 %v176, %v212
  %v229 = vadd.f32 %v177, %v213
  %v230 = vadd.f32 %v178, %v214
  %v231 = vadd.f32 %v179, %v215
  %v232 = vadd.f32 %v180, %v216
  %v233 = vadd.f32 %v181, %v217
  %v234 = vadd.f32 %v182, %v218
  %v235 = vadd.f32 %v183, %v219
  %v236 = vadd.f32 %v184, %v220
  %v237 = vadd.f32 %v185, %v221
  %v238 = vld [vmem:[#allocation2 + $0x2] sm:$0xff]
  %v239 = vld [vmem:[#allocation2 + $0xa] sm:$0xff]
  %v240 = vld [vmem:[#allocation2 + $0x1a] sm:$0xff]
  %v241 = vld [vmem:[#allocation2 + $0x22] sm:$0xff]
  %v242 = vld [vmem:[#allocation2 + $0x32] sm:$0xff]
  %v243 = vld [vmem:[#allocation2 + $0x3a] sm:$0xff]
  %v244 = vld [vmem:[#allocation2 + $0x4a] sm:$0xff]
  %v245 = vld [vmem:[#allocation2 + $0x52] sm:$0xff]
  %v246 = vld [vmem:[#allocation2 + $0x62] sm:$0xff]
  %v247 = vld [vmem:[#allocation2 + $0x6a] sm:$0xff]
  %v248 = vld [vmem:[#allocation2 + $0x7a] sm:$0xff]
  %v249 = vld [vmem:[#allocation2 + $0x82] sm:$0xff]
  %v250 = vld [vmem:[#allocation2 + $0x92] sm:$0xff]
  %v251 = vld [vmem:[#allocation2 + $0x9a] sm:$0xff]
  %v252 = vld [vmem:[#allocation2 + $0xaa] sm:$0xff]
  %v253 = vld [vmem:[#allocation2 + $0xb2] sm:$0xff]
  %v254 = vlaneseq
  %v255 = vshrl.u32 %v254, 7
  %v256 = vsub.s32 2, %v255
  %v257 = vrot.slane %v125, %v256
  %v258 = vmul.f32 %v238, %v257
  %v259 = vmul.f32 %v239, %v257
  %v260 = vmul.f32 %v240, %v257
  %v261 = vmul.f32 %v241, %v257
  %v262 = vmul.f32 %v242, %v257
  %v263 = vmul.f32 %v243, %v257
  %v264 = vmul.f32 %v244, %v257
  %v265 = vmul.f32 %v245, %v257
  %v266 = vmul.f32 %v246, %v257
  %v267 = vmul.f32 %v247, %v257
  %v268 = vmul.f32 %v248, %v257
  %v269 = vmul.f32 %v249, %v257
  %v270 = vmul.f32 %v250, %v257
  %v271 = vmul.f32 %v251, %v257
  %v272 = vmul.f32 %v252, %v257
  %v273 = vmul.f32 %v253, %v257
  %v274 = vadd.f32 %v222, %v258
  %v275 = vadd.f32 %v223, %v259
  %v276 = vadd.f32 %v224, %v260
  %v277 = vadd.f32 %v225, %v261
  %v278 = vadd.f32 %v226, %v262
  %v279 = vadd.f32 %v227, %v263
  %v280 = vadd.f32 %v228, %v264
  %v281 = vadd.f32 %v229, %v265
  %v282 = vadd.f32 %v230, %v266
  %v283 = vadd.f32 %v231, %v267
  %v284 = vadd.f32 %v232, %v268
  %v285 = vadd.f32 %v233, %v269
  %v286 = vadd.f32 %v234, %v270
  %v287 = vadd.f32 %v235, %v271
  %v288 = vadd.f32 %v236, %v272
  %v289 = vadd.f32 %v237, %v273
  %v290 = vld [vmem:[%s92] sm:$0xff]
  %v291 = vld [vmem:[%s92 + $0x8] sm:$0xff]
  %v292 = vld [vmem:[%s92 + $0x18] sm:$0xff]
  %v293 = vld [vmem:[%s92 + $0x20] sm:$0xff]
  %v294 = vld [vmem:[%s92 + $0x30] sm:$0xff]
  %v295 = vld [vmem:[%s92 + $0x38] sm:$0xff]
  %v296 = vld [vmem:[%s92 + $0x48] sm:$0xff]
  %v297 = vld [vmem:[%s92 + $0x50] sm:$0xff]
  %v298 = vld [vmem:[%s92 + $0x60] sm:$0xff]
  %v299 = vld [vmem:[%s92 + $0x68] sm:$0xff]
  %v300 = vld [vmem:[%s92 + $0x78] sm:$0xff]
  %v301 = vld [vmem:[%s92 + $0x80] sm:$0xff]
  %v302 = vld [vmem:[%s92 + $0x90] sm:$0xff]
  %v303 = vld [vmem:[%s92 + $0x98] sm:$0xff]
  %v304 = vld [vmem:[%s92 + $0xa8] sm:$0xff]
  %v305 = vld [vmem:[%s92 + $0xb0] sm:$0xff]
  %v306 = vlaneseq
  %v307 = vshrl.u32 %v306, 7
  %v308 = vsub.s32 3, %v307
  %v309 = vrot.slane %v125, %v308
  %v310 = vmul.f32 %v290, %v309
  %v311 = vmul.f32 %v291, %v309
  %v312 = vmul.f32 %v292, %v309
  %v313 = vmul.f32 %v293, %v309
  %v314 = vmul.f32 %v294, %v309
  %v315 = vmul.f32 %v295, %v309
  %v316 = vmul.f32 %v296, %v309
  %v317 = vmul.f32 %v297, %v309
  %v318 = vmul.f32 %v298, %v309
  %v319 = vmul.f32 %v299, %v309
  %v320 = vmul.f32 %v300, %v309
  %v321 = vmul.f32 %v301, %v309
  %v322 = vmul.f32 %v302, %v309
  %v323 = vmul.f32 %v303, %v309
  %v324 = vmul.f32 %v304, %v309
  %v325 = vmul.f32 %v305, %v309
  %v326 = vadd.f32 %v274, %v310
  %v327 = vadd.f32 %v275, %v311
  %v328 = vadd.f32 %v276, %v312
  %v329 = vadd.f32 %v277, %v313
  %v330 = vadd.f32 %v278, %v314
  %v331 = vadd.f32 %v279, %v315
  %v332 = vadd.f32 %v280, %v316
  %v333 = vadd.f32 %v281, %v317
  %v334 = vadd.f32 %v282, %v318
  %v335 = vadd.f32 %v283, %v319
  %v336 = vadd.f32 %v284, %v320
  %v337 = vadd.f32 %v285, %v321
  %v338 = vadd.f32 %v286, %v322
  %v339 = vadd.f32 %v287, %v323
  %v340 = vadd.f32 %v288, %v324
  %v341 = vadd.f32 %v289, %v325
  %v342 = vld [vmem:[%s92 + $0x1] sm:$0xff]
  %v343 = vld [vmem:[%s92 + $0x9] sm:$0xff]
  %v344 = vld [vmem:[%s92 + $0x19] sm:$0xff]
  %v345 = vld [vmem:[%s92 + $0x21] sm:$0xff]
  %v346 = vld [vmem:[%s92 + $0x31] sm:$0xff]
  %v347 = vld [vmem:[%s92 + $0x39] sm:$0xff]
  %v348 = vld [vmem:[%s92 + $0x49] sm:$0xff]
  %v349 = vld [vmem:[%s92 + $0x51] sm:$0xff]
  %v350 = vld [vmem:[%s92 + $0x61] sm:$0xff]
  %v351 = vld [vmem:[%s92 + $0x69] sm:$0xff]
  %v352 = vld [vmem:[%s92 + $0x79] sm:$0xff]
  %v353 = vld [vmem:[%s92 + $0x81] sm:$0xff]
  %v354 = vld [vmem:[%s92 + $0x91] sm:$0xff]
  %v355 = vld [vmem:[%s92 + $0x99] sm:$0xff]
  %v356 = vld [vmem:[%s92 + $0xa9] sm:$0xff]
  %v357 = vld [vmem:[%s92 + $0xb1] sm:$0xff]
  %v358 = vlaneseq
  %v359 = vshrl.u32 %v358, 7
  %v360 = vsub.s32 4, %v359
  %v361 = vrot.slane %v125, %v360
  %v362 = vmul.f32 %v342, %v361
  %v363 = vmul.f32 %v343, %v361
  %v364 = vmul.f32 %v344, %v361
  %v365 = vmul.f32 %v345, %v361
  %v366 = vmul.f32 %v346, %v361
  %v367 = vmul.f32 %v347, %v361
  %v368 = vmul.f32 %v348, %v361
  %v369 = vmul.f32 %v349, %v361
  %v370 = vmul.f32 %v350, %v361
  %v371 = vmul.f32 %v351, %v361
  %v372 = vmul.f32 %v352, %v361
  %v373 = vmul.f32 %v353, %v361
  %v374 = vmul.f32 %v354, %v361
  %v375 = vmul.f32 %v355, %v361
  %v376 = vmul.f32 %v356, %v361
  %v377 = vmul.f32 %v357, %v361
  %v378 = vadd.f32 %v326, %v362
  %v379 = vadd.f32 %v327, %v363
  %v380 = vadd.f32 %v328, %v364
  %v381 = vadd.f32 %v329, %v365
  %v382 = vadd.f32 %v330, %v366
  %v383 = vadd.f32 %v331, %v367
  %v384 = vadd.f32 %v332, %v368
  %v385 = vadd.f32 %v333, %v369
  %v386 = vadd.f32 %v334, %v370
  %v387 = vadd.f32 %v335, %v371
  %v388 = vadd.f32 %v336, %v372
  %v389 = vadd.f32 %v337, %v373
  %v390 = vadd.f32 %v338, %v374
  %v391 = vadd.f32 %v339, %v375
  %v392 = vadd.f32 %v340, %v376
  %v393 = vadd.f32 %v341, %v377
  %v394 = vld [vmem:[%s92 + $0x2] sm:$0xff]
  %v395 = vld [vmem:[%s92 + $0xa] sm:$0xff]
  %v396 = vld [vmem:[%s92 + $0x1a] sm:$0xff]
  %v397 = vld [vmem:[%s92 + $0x22] sm:$0xff]
  %v398 = vld [vmem:[%s92 + $0x32] sm:$0xff]
  %v399 = vld [vmem:[%s92 + $0x3a] sm:$0xff]
  %v400 = vld [vmem:[%s92 + $0x4a] sm:$0xff]
  %v401 = vld [vmem:[%s92 + $0x52] sm:$0xff]
  %v402 = vld [vmem:[%s92 + $0x62] sm:$0xff]
  %v403 = vld [vmem:[%s92 + $0x6a] sm:$0xff]
  %v404 = vld [vmem:[%s92 + $0x7a] sm:$0xff]
  %v405 = vld [vmem:[%s92 + $0x82] sm:$0xff]
  %v406 = vld [vmem:[%s92 + $0x92] sm:$0xff]
  %v407 = vld [vmem:[%s92 + $0x9a] sm:$0xff]
  %v408 = vld [vmem:[%s92 + $0xaa] sm:$0xff]
  %v409 = vld [vmem:[%s92 + $0xb2] sm:$0xff]
  %v410 = vlaneseq
  %v411 = vshrl.u32 %v410, 7
  %v412 = vsub.s32 5, %v411
  %v413 = vrot.slane %v125, %v412
  %v414 = vmul.f32 %v394, %v413
  %v415 = vmul.f32 %v395, %v413
  %v416 = vmul.f32 %v396, %v413
  %v417 = vmul.f32 %v397, %v413
  %v418 = vmul.f32 %v398, %v413
  %v419 = vmul.f32 %v399, %v413
  %v420 = vmul.f32 %v400, %v413
  %v421 = vmul.f32 %v401, %v413
  %v422 = vmul.f32 %v402, %v413
  %v423 = vmul.f32 %v403, %v413
  %v424 = vmul.f32 %v404, %v413
  %v425 = vmul.f32 %v405, %v413
  %v426 = vmul.f32 %v406, %v413
  %v427 = vmul.f32 %v407, %v413
  %v428 = vmul.f32 %v408, %v413
  %v429 = vmul.f32 %v409, %v413
  %v430 = vadd.f32 %v378, %v414
  %v431 = vadd.f32 %v379, %v415
  %v432 = vadd.f32 %v380, %v416
  %v433 = vadd.f32 %v381, %v417
  %v434 = vadd.f32 %v382, %v418
  %v435 = vadd.f32 %v383, %v419
  %v436 = vadd.f32 %v384, %v420
  %v437 = vadd.f32 %v385, %v421
  %v438 = vadd.f32 %v386, %v422
  %v439 = vadd.f32 %v387, %v423
  %v440 = vadd.f32 %v388, %v424
  %v441 = vadd.f32 %v389, %v425
  %v442 = vadd.f32 %v390, %v426
  %v443 = vadd.f32 %v391, %v427
  %v444 = vadd.f32 %v392, %v428
  %v445 = vadd.f32 %v393, %v429
  %s446 = scalar_lea.vmem [#allocation2], 48
  %v447 = vld [vmem:[%s446] sm:$0xff]
  %v448 = vld [vmem:[%s446 + $0x8] sm:$0xff]
  %v449 = vld [vmem:[%s446 + $0x18] sm:$0xff]
  %v450 = vld [vmem:[%s446 + $0x20] sm:$0xff]
  %v451 = vld [vmem:[%s446 + $0x30] sm:$0xff]
  %v452 = vld [vmem:[%s446 + $0x38] sm:$0xff]
  %v453 = vld [vmem:[%s446 + $0x48] sm:$0xff]
  %v454 = vld [vmem:[%s446 + $0x50] sm:$0xff]
  %v455 = vld [vmem:[%s446 + $0x60] sm:$0xff]
  %v456 = vld [vmem:[%s446 + $0x68] sm:$0xff]
  %v457 = vld [vmem:[%s446 + $0x78] sm:$0xff]
  %v458 = vld [vmem:[%s446 + $0x80] sm:$0xff]
  %v459 = vld [vmem:[%s446 + $0x90] sm:$0xff]
  %v460 = vld [vmem:[%s446 + $0x98] sm:$0xff]
  %v461 = vld [vmem:[%s446 + $0xa8] sm:$0xff]
  %v462 = vld [vmem:[%s446 + $0xb0] sm:$0xff]
  %v463 = vlaneseq
  %v464 = vshrl.u32 %v463, 7
  %v465 = vsub.s32 6, %v464
  %v466 = vrot.slane %v125, %v465
  %v467 = vmul.f32 %v447, %v466
  %v468 = vmul.f32 %v448, %v466
  %v469 = vmul.f32 %v449, %v466
  %v470 = vmul.f32 %v450, %v466
  %v471 = vmul.f32 %v451, %v466
  %v472 = vmul.f32 %v452, %v466
  %v473 = vmul.f32 %v453, %v466
  %v474 = vmul.f32 %v454, %v466
  %v475 = vmul.f32 %v455, %v466
  %v476 = vmul.f32 %v456, %v466
  %v477 = vmul.f32 %v457, %v466
  %v478 = vmul.f32 %v458, %v466
  %v479 = vmul.f32 %v459, %v466
  %v480 = vmul.f32 %v460, %v466
  %v481 = vmul.f32 %v461, %v466
  %v482 = vmul.f32 %v462, %v466
  %v483 = vadd.f32 %v430, %v467
  %v484 = vadd.f32 %v431, %v468
  %v485 = vadd.f32 %v432, %v469
  %v486 = vadd.f32 %v433, %v470
  %v487 = vadd.f32 %v434, %v471
  %v488 = vadd.f32 %v435, %v472
  %v489 = vadd.f32 %v436, %v473
  %v490 = vadd.f32 %v437, %v474
  %v491 = vadd.f32 %v438, %v475
  %v492 = vadd.f32 %v439, %v476
  %v493 = vadd.f32 %v440, %v477
  %v494 = vadd.f32 %v441, %v478
  %v495 = vadd.f32 %v442, %v479
  %v496 = vadd.f32 %v443, %v480
  %v497 = vadd.f32 %v444, %v481
  %v498 = vadd.f32 %v445, %v482
  %v499 = vld [vmem:[%s446 + $0x1] sm:$0xff]
  %v500 = vld [vmem:[%s446 + $0x9] sm:$0xff]
  %v501 = vld [vmem:[%s446 + $0x19] sm:$0xff]
  %v502 = vld [vmem:[%s446 + $0x21] sm:$0xff]
  %v503 = vld [vmem:[%s446 + $0x31] sm:$0xff]
  %v504 = vld [vmem:[%s446 + $0x39] sm:$0xff]
  %v505 = vld [vmem:[%s446 + $0x49] sm:$0xff]
  %v506 = vld [vmem:[%s446 + $0x51] sm:$0xff]
  %v507 = vld [vmem:[%s446 + $0x61] sm:$0xff]
  %v508 = vld [vmem:[%s446 + $0x69] sm:$0xff]
  %v509 = vld [vmem:[%s446 + $0x79] sm:$0xff]
  %v510 = vld [vmem:[%s446 + $0x81] sm:$0xff]
  %v511 = vld [vmem:[%s446 + $0x91] sm:$0xff]
  %v512 = vld [vmem:[%s446 + $0x99] sm:$0xff]
  %v513 = vld [vmem:[%s446 + $0xa9] sm:$0xff]
  %v514 = vld [vmem:[%s446 + $0xb1] sm:$0xff]
  %v515 = vlaneseq
  %v516 = vshrl.u32 %v515, 7
  %v517 = vsub.s32 7, %v516
  %v518 = vrot.slane %v125, %v517
  %v519 = vmul.f32 %v499, %v518
  %v520 = vmul.f32 %v500, %v518
  %v521 = vmul.f32 %v501, %v518
  %v522 = vmul.f32 %v502, %v518
  %v523 = vmul.f32 %v503, %v518
  %v524 = vmul.f32 %v504, %v518
  %v525 = vmul.f32 %v505, %v518
  %v526 = vmul.f32 %v506, %v518
  %v527 = vmul.f32 %v507, %v518
  %v528 = vmul.f32 %v508, %v518
  %v529 = vmul.f32 %v509, %v518
  %v530 = vmul.f32 %v510, %v518
  %v531 = vmul.f32 %v511, %v518
  %v532 = vmul.f32 %v512, %v518
  %v533 = vmul.f32 %v513, %v518
  %v534 = vmul.f32 %v514, %v518
  %v535 = vadd.f32 %v483, %v519
  %v536 = vadd.f32 %v484, %v520
  %v537 = vadd.f32 %v485, %v521
  %v538 = vadd.f32 %v486, %v522
  %v539 = vadd.f32 %v487, %v523
  %v540 = vadd.f32 %v488, %v524
  %v541 = vadd.f32 %v489, %v525
  %v542 = vadd.f32 %v490, %v526
  %v543 = vadd.f32 %v491, %v527
  %v544 = vadd.f32 %v492, %v528
  %v545 = vadd.f32 %v493, %v529
  %v546 = vadd.f32 %v494, %v530
  %v547 = vadd.f32 %v495, %v531
  %v548 = vadd.f32 %v496, %v532
  %v549 = vadd.f32 %v497, %v533
  %v550 = vadd.f32 %v498, %v534
  %v551 = vld [vmem:[%s446 + $0x2] sm:$0xff]
  %v552 = vld [vmem:[%s446 + $0xa] sm:$0xff]
  %v553 = vld [vmem:[%s446 + $0x1a] sm:$0xff]
  %v554 = vld [vmem:[%s446 + $0x22] sm:$0xff]
  %v555 = vld [vmem:[%s446 + $0x32] sm:$0xff]
  %v556 = vld [vmem:[%s446 + $0x3a] sm:$0xff]
  %v557 = vld [vmem:[%s446 + $0x4a] sm:$0xff]
  %v558 = vld [vmem:[%s446 + $0x52] sm:$0xff]
  %v559 = vld [vmem:[%s446 + $0x62] sm:$0xff]
  %v560 = vld [vmem:[%s446 + $0x6a] sm:$0xff]
  %v561 = vld [vmem:[%s446 + $0x7a] sm:$0xff]
  %v562 = vld [vmem:[%s446 + $0x82] sm:$0xff]
  %v563 = vld [vmem:[%s446 + $0x92] sm:$0xff]
  %v564 = vld [vmem:[%s446 + $0x9a] sm:$0xff]
  %v565 = vld [vmem:[%s446 + $0xaa] sm:$0xff]
  %v566 = vld [vmem:[%s446 + $0xb2] sm:$0xff]
  %v567 = vlaneseq
  %v568 = vshrl.u32 %v567, 7
  %v569 = vsub.s32 0, %v568
  %v570 = vrot.slane %v126, %v569
  %v571 = vmul.f32 %v551, %v570
  %v572 = vmul.f32 %v552, %v570
  %v573 = vmul.f32 %v553, %v570
  %v574 = vmul.f32 %v554, %v570
  %v575 = vmul.f32 %v555, %v570
  %v576 = vmul.f32 %v556, %v570
  %v577 = vmul.f32 %v557, %v570
  %v578 = vmul.f32 %v558, %v570
  %v579 = vmul.f32 %v559, %v570
  %v580 = vmul.f32 %v560, %v570
  %v581 = vmul.f32 %v561, %v570
  %v582 = vmul.f32 %v562, %v570
  %v583 = vmul.f32 %v563, %v570
  %v584 = vmul.f32 %v564, %v570
  %v585 = vmul.f32 %v565, %v570
  %v586 = vmul.f32 %v566, %v570
  %v587 = vadd.f32 %v535, %v571
  %v588 = vadd.f32 %v536, %v572
  %v589 = vadd.f32 %v537, %v573
  %v590 = vadd.f32 %v538, %v574
  %v591 = vadd.f32 %v539, %v575
  %v592 = vadd.f32 %v540, %v576
  %v593 = vadd.f32 %v541, %v577
  %v594 = vadd.f32 %v542, %v578
  %v595 = vadd.f32 %v543, %v579
  %v596 = vadd.f32 %v544, %v580
  %v597 = vadd.f32 %v545, %v581
  %v598 = vadd.f32 %v546, %v582
  %v599 = vadd.f32 %v547, %v583
  %v600 = vadd.f32 %v548, %v584
  %v601 = vadd.f32 %v549, %v585
  %v602 = vadd.f32 %v550, %v586
  %603 = vst.msk [vmem:[%s3] sm:$0xff] %vm14, %v587
  %604 = vst.msk [vmem:[%s3 + $0x8] sm:$0xff] %vm14, %v588
  %605 = vst.msk [vmem:[%s3 + $0x10] sm:$0xff] %vm14, %v589
  %606 = vst.msk [vmem:[%s3 + $0x18] sm:$0xff] %vm14, %v590
  %607 = vst.msk [vmem:[%s3 + $0x20] sm:$0xff] %vm14, %v591
  %608 = vst.msk [vmem:[%s3 + $0x28] sm:$0xff] %vm14, %v592
  %609 = vst.msk [vmem:[%s3 + $0x30] sm:$0xff] %vm14, %v593
  %610 = vst.msk [vmem:[%s3 + $0x38] sm:$0xff] %vm14, %v594
  %611 = vst.msk [vmem:[%s3 + $0x40] sm:$0xff] %vm14, %v595
  %612 = vst.msk [vmem:[%s3 + $0x48] sm:$0xff] %vm14, %v596
  %613 = vst.msk [vmem:[%s3 + $0x50] sm:$0xff] %vm14, %v597
  %614 = vst.msk [vmem:[%s3 + $0x58] sm:$0xff] %vm14, %v598
  %615 = vst.msk [vmem:[%s3 + $0x60] sm:$0xff] %vm14, %v599
  %616 = vst.msk [vmem:[%s3 + $0x68] sm:$0xff] %vm14, %v600
  %617 = vst.msk [vmem:[%s3 + $0x70] sm:$0xff] %vm14, %v601
  %618 = vst.msk [vmem:[%s3 + $0x78] sm:$0xff] %vm14, %v602
  %s619 = scalar_lea.vmem [#allocation2], 192
  %v620 = vld [vmem:[%s619] sm:$0xff]
  %v621 = vld [vmem:[%s619 + $0x8] sm:$0xff]
  %v622 = vld [vmem:[%s619 + $0x18] sm:$0xff]
  %v623 = vld [vmem:[%s619 + $0x20] sm:$0xff]
  %v624 = vld [vmem:[%s619 + $0x30] sm:$0xff]
  %v625 = vld [vmem:[%s619 + $0x38] sm:$0xff]
  %v626 = vld [vmem:[%s619 + $0x48] sm:$0xff]
  %v627 = vld [vmem:[%s619 + $0x50] sm:$0xff]
  %v628 = vld [vmem:[%s619 + $0x60] sm:$0xff]
  %v629 = vld [vmem:[%s619 + $0x68] sm:$0xff]
  %v630 = vld [vmem:[%s619 + $0x78] sm:$0xff]
  %v631 = vld [vmem:[%s619 + $0x80] sm:$0xff]
  %v632 = vld [vmem:[%s619 + $0x90] sm:$0xff]
  %v633 = vld [vmem:[%s619 + $0x98] sm:$0xff]
  %v634 = vld [vmem:[%s619 + $0xa8] sm:$0xff]
  %v635 = vld [vmem:[%s619 + $0xb0] sm:$0xff]
  %v636 = vmul.f32 %v620, %v153
  %v637 = vmul.f32 %v621, %v153
  %v638 = vmul.f32 %v622, %v153
  %v639 = vmul.f32 %v623, %v153
  %v640 = vmul.f32 %v624, %v153
  %v641 = vmul.f32 %v625, %v153
  %v642 = vmul.f32 %v626, %v153
  %v643 = vmul.f32 %v627, %v153
  %v644 = vmul.f32 %v628, %v153
  %v645 = vmul.f32 %v629, %v153
  %v646 = vmul.f32 %v630, %v153
  %v647 = vmul.f32 %v631, %v153
  %v648 = vmul.f32 %v632, %v153
  %v649 = vmul.f32 %v633, %v153
  %v650 = vmul.f32 %v634, %v153
  %v651 = vmul.f32 %v635, %v153
  %v652 = vadd.f32 %v132, %v636
  %v653 = vadd.f32 %v132, %v637
  %v654 = vadd.f32 %v132, %v638
  %v655 = vadd.f32 %v132, %v639
  %v656 = vadd.f32 %v132, %v640
  %v657 = vadd.f32 %v132, %v641
  %v658 = vadd.f32 %v132, %v642
  %v659 = vadd.f32 %v132, %v643
  %v660 = vadd.f32 %v132, %v644
  %v661 = vadd.f32 %v132, %v645
  %v662 = vadd.f32 %v132, %v646
  %v663 = vadd.f32 %v132, %v647
  %v664 = vadd.f32 %v132, %v648
  %v665 = vadd.f32 %v132, %v649
  %v666 = vadd.f32 %v132, %v650
  %v667 = vadd.f32 %v132, %v651
  %v668 = vld [vmem:[%s619 + $0x1] sm:$0xff]
  %v669 = vld [vmem:[%s619 + $0x9] sm:$0xff]
  %v670 = vld [vmem:[%s619 + $0x19] sm:$0xff]
  %v671 = vld [vmem:[%s619 + $0x21] sm:$0xff]
  %v672 = vld [vmem:[%s619 + $0x31] sm:$0xff]
  %v673 = vld [vmem:[%s619 + $0x39] sm:$0xff]
  %v674 = vld [vmem:[%s619 + $0x49] sm:$0xff]
  %v675 = vld [vmem:[%s619 + $0x51] sm:$0xff]
  %v676 = vld [vmem:[%s619 + $0x61] sm:$0xff]
  %v677 = vld [vmem:[%s619 + $0x69] sm:$0xff]
  %v678 = vld [vmem:[%s619 + $0x79] sm:$0xff]
  %v679 = vld [vmem:[%s619 + $0x81] sm:$0xff]
  %v680 = vld [vmem:[%s619 + $0x91] sm:$0xff]
  %v681 = vld [vmem:[%s619 + $0x99] sm:$0xff]
  %v682 = vld [vmem:[%s619 + $0xa9] sm:$0xff]
  %v683 = vld [vmem:[%s619 + $0xb1] sm:$0xff]
  %v684 = vmul.f32 %v668, %v205
  %v685 = vmul.f32 %v669, %v205
  %v686 = vmul.f32 %v670, %v205
  %v687 = vmul.f32 %v671, %v205
  %v688 = vmul.f32 %v672, %v205
  %v689 = vmul.f32 %v673, %v205
  %v690 = vmul.f32 %v674, %v205
  %v691 = vmul.f32 %v675, %v205
  %v692 = vmul.f32 %v676, %v205
  %v693 = vmul.f32 %v677, %v205
  %v694 = vmul.f32 %v678, %v205
  %v695 = vmul.f32 %v679, %v205
  %v696 = vmul.f32 %v680, %v205
  %v697 = vmul.f32 %v681, %v205
  %v698 = vmul.f32 %v682, %v205
  %v699 = vmul.f32 %v683, %v205
  %v700 = vadd.f32 %v652, %v684
  %v701 = vadd.f32 %v653, %v685
  %v702 = vadd.f32 %v654, %v686
  %v703 = vadd.f32 %v655, %v687
  %v704 = vadd.f32 %v656, %v688
  %v705 = vadd.f32 %v657, %v689
  %v706 = vadd.f32 %v658, %v690
  %v707 = vadd.f32 %v659, %v691
  %v708 = vadd.f32 %v660, %v692
  %v709 = vadd.f32 %v661, %v693
  %v710 = vadd.f32 %v662, %v694
  %v711 = vadd.f32 %v663, %v695
  %v712 = vadd.f32 %v664, %v696
  %v713 = vadd.f32 %v665, %v697
  %v714 = vadd.f32 %v666, %v698
  %v715 = vadd.f32 %v667, %v699
  %v716 = vld [vmem:[%s619 + $0x2] sm:$0xff]
  %v717 = vld [vmem:[%s619 + $0xa] sm:$0xff]
  %v718 = vld [vmem:[%s619 + $0x1a] sm:$0xff]
  %v719 = vld [vmem:[%s619 + $0x22] sm:$0xff]
  %v720 = vld [vmem:[%s619 + $0x32] sm:$0xff]
  %v721 = vld [vmem:[%s619 + $0x3a] sm:$0xff]
  %v722 = vld [vmem:[%s619 + $0x4a] sm:$0xff]
  %v723 = vld [vmem:[%s619 + $0x52] sm:$0xff]
  %v724 = vld [vmem:[%s619 + $0x62] sm:$0xff]
  %v725 = vld [vmem:[%s619 + $0x6a] sm:$0xff]
  %v726 = vld [vmem:[%s619 + $0x7a] sm:$0xff]
  %v727 = vld [vmem:[%s619 + $0x82] sm:$0xff]
  %v728 = vld [vmem:[%s619 + $0x92] sm:$0xff]
  %v729 = vld [vmem:[%s619 + $0x9a] sm:$0xff]
  %v730 = vld [vmem:[%s619 + $0xaa] sm:$0xff]
  %v731 = vld [vmem:[%s619 + $0xb2] sm:$0xff]
  %v732 = vmul.f32 %v716, %v257
  %v733 = vmul.f32 %v717, %v257
  %v734 = vmul.f32 %v718, %v257
  %v735 = vmul.f32 %v719, %v257
  %v736 = vmul.f32 %v720, %v257
  %v737 = vmul.f32 %v721, %v257
  %v738 = vmul.f32 %v722, %v257
  %v739 = vmul.f32 %v723, %v257
  %v740 = vmul.f32 %v724, %v257
  %v741 = vmul.f32 %v725, %v257
  %v742 = vmul.f32 %v726, %v257
  %v743 = vmul.f32 %v727, %v257
  %v744 = vmul.f32 %v728, %v257
  %v745 = vmul.f32 %v729, %v257
  %v746 = vmul.f32 %v730, %v257
  %v747 = vmul.f32 %v731, %v257
  %v748 = vadd.f32 %v700, %v732
  %v749 = vadd.f32 %v701, %v733
  %v750 = vadd.f32 %v702, %v734
  %v751 = vadd.f32 %v703, %v735
  %v752 = vadd.f32 %v704, %v736
  %v753 = vadd.f32 %v705, %v737
  %v754 = vadd.f32 %v706, %v738
  %v755 = vadd.f32 %v707, %v739
  %v756 = vadd.f32 %v708, %v740
  %v757 = vadd.f32 %v709, %v741
  %v758 = vadd.f32 %v710, %v742
  %v759 = vadd.f32 %v711, %v743
  %v760 = vadd.f32 %v712, %v744
  %v761 = vadd.f32 %v713, %v745
  %v762 = vadd.f32 %v714, %v746
  %v763 = vadd.f32 %v715, %v747
  %s764 = scalar_lea.vmem [#allocation2], 216
  %v765 = vld [vmem:[%s764] sm:$0xff]
  %v766 = vld [vmem:[%s764 + $0x8] sm:$0xff]
  %v767 = vld [vmem:[%s764 + $0x18] sm:$0xff]
  %v768 = vld [vmem:[%s764 + $0x20] sm:$0xff]
  %v769 = vld [vmem:[%s764 + $0x30] sm:$0xff]
  %v770 = vld [vmem:[%s764 + $0x38] sm:$0xff]
  %v771 = vld [vmem:[%s764 + $0x48] sm:$0xff]
  %v772 = vld [vmem:[%s764 + $0x50] sm:$0xff]
  %v773 = vld [vmem:[%s764 + $0x60] sm:$0xff]
  %v774 = vld [vmem:[%s764 + $0x68] sm:$0xff]
  %v775 = vld [vmem:[%s764 + $0x78] sm:$0xff]
  %v776 = vld [vmem:[%s764 + $0x80] sm:$0xff]
  %v777 = vld [vmem:[%s764 + $0x90] sm:$0xff]
  %v778 = vld [vmem:[%s764 + $0x98] sm:$0xff]
  %v779 = vld [vmem:[%s764 + $0xa8] sm:$0xff]
  %v780 = vld [vmem:[%s764 + $0xb0] sm:$0xff]
  %v781 = vmul.f32 %v765, %v309
  %v782 = vmul.f32 %v766, %v309
  %v783 = vmul.f32 %v767, %v309
  %v784 = vmul.f32 %v768, %v309
  %v785 = vmul.f32 %v769, %v309
  %v786 = vmul.f32 %v770, %v309
  %v787 = vmul.f32 %v771, %v309
  %v788 = vmul.f32 %v772, %v309
  %v789 = vmul.f32 %v773, %v309
  %v790 = vmul.f32 %v774, %v309
  %v791 = vmul.f32 %v775, %v309
  %v792 = vmul.f32 %v776, %v309
  %v793 = vmul.f32 %v777, %v309
  %v794 = vmul.f32 %v778, %v309
  %v795 = vmul.f32 %v779, %v309
  %v796 = vmul.f32 %v780, %v309
  %v797 = vadd.f32 %v748, %v781
  %v798 = vadd.f32 %v749, %v782
  %v799 = vadd.f32 %v750, %v783
  %v800 = vadd.f32 %v751, %v784
  %v801 = vadd.f32 %v752, %v785
  %v802 = vadd.f32 %v753, %v786
  %v803 = vadd.f32 %v754, %v787
  %v804 = vadd.f32 %v755, %v788
  %v805 = vadd.f32 %v756, %v789
  %v806 = vadd.f32 %v757, %v790
  %v807 = vadd.f32 %v758, %v791
  %v808 = vadd.f32 %v759, %v792
  %v809 = vadd.f32 %v760, %v793
  %v810 = vadd.f32 %v761, %v794
  %v811 = vadd.f32 %v762, %v795
  %v812 = vadd.f32 %v763, %v796
  %v813 = vld [vmem:[%s764 + $0x1] sm:$0xff]
  %v814 = vld [vmem:[%s764 + $0x9] sm:$0xff]
  %v815 = vld [vmem:[%s764 + $0x19] sm:$0xff]
  %v816 = vld [vmem:[%s764 + $0x21] sm:$0xff]
  %v817 = vld [vmem:[%s764 + $0x31] sm:$0xff]
  %v818 = vld [vmem:[%s764 + $0x39] sm:$0xff]
  %v819 = vld [vmem:[%s764 + $0x49] sm:$0xff]
  %v820 = vld [vmem:[%s764 + $0x51] sm:$0xff]
  %v821 = vld [vmem:[%s764 + $0x61] sm:$0xff]
  %v822 = vld [vmem:[%s764 + $0x69] sm:$0xff]
  %v823 = vld [vmem:[%s764 + $0x79] sm:$0xff]
  %v824 = vld [vmem:[%s764 + $0x81] sm:$0xff]
  %v825 = vld [vmem:[%s764 + $0x91] sm:$0xff]
  %v826 = vld [vmem:[%s764 + $0x99] sm:$0xff]
  %v827 = vld [vmem:[%s764 + $0xa9] sm:$0xff]
  %v828 = vld [vmem:[%s764 + $0xb1] sm:$0xff]
  %v829 = vmul.f32 %v813, %v361
  %v830 = vmul.f32 %v814, %v361
  %v831 = vmul.f32 %v815, %v361
  %v832 = vmul.f32 %v816, %v361
  %v833 = vmul.f32 %v817, %v361
  %v834 = vmul.f32 %v818, %v361
  %v835 = vmul.f32 %v819, %v361
  %v836 = vmul.f32 %v820, %v361
  %v837 = vmul.f32 %v821, %v361
  %v838 = vmul.f32 %v822, %v361
  %v839 = vmul.f32 %v823, %v361
  %v840 = vmul.f32 %v824, %v361
  %v841 = vmul.f32 %v825, %v361
  %v842 = vmul.f32 %v826, %v361
  %v843 = vmul.f32 %v827, %v361
  %v844 = vmul.f32 %v828, %v361
  %v845 = vadd.f32 %v797, %v829
  %v846 = vadd.f32 %v798, %v830
  %v847 = vadd.f32 %v799, %v831
  %v848 = vadd.f32 %v800, %v832
  %v849 = vadd.f32 %v801, %v833
  %v850 = vadd.f32 %v802, %v834
  %v851 = vadd.f32 %v803, %v835
  %v852 = vadd.f32 %v804, %v836
  %v853 = vadd.f32 %v805, %v837
  %v854 = vadd.f32 %v806, %v838
  %v855 = vadd.f32 %v807, %v839
  %v856 = vadd.f32 %v808, %v840
  %v857 = vadd.f32 %v809, %v841
  %v858 = vadd.f32 %v810, %v842
  %v859 = vadd.f32 %v811, %v843
  %v860 = vadd.f32 %v812, %v844
  %v861 = vld [vmem:[%s764 + $0x2] sm:$0xff]
  %v862 = vld [vmem:[%s764 + $0xa] sm:$0xff]
  %v863 = vld [vmem:[%s764 + $0x1a] sm:$0xff]
  %v864 = vld [vmem:[%s764 + $0x22] sm:$0xff]
  %v865 = vld [vmem:[%s764 + $0x32] sm:$0xff]
  %v866 = vld [vmem:[%s764 + $0x3a] sm:$0xff]
  %v867 = vld [vmem:[%s764 + $0x4a] sm:$0xff]
  %v868 = vld [vmem:[%s764 + $0x52] sm:$0xff]
  %v869 = vld [vmem:[%s764 + $0x62] sm:$0xff]
  %v870 = vld [vmem:[%s764 + $0x6a] sm:$0xff]
  %v871 = vld [vmem:[%s764 + $0x7a] sm:$0xff]
  %v872 = vld [vmem:[%s764 + $0x82] sm:$0xff]
  %v873 = vld [vmem:[%s764 + $0x92] sm:$0xff]
  %v874 = vld [vmem:[%s764 + $0x9a] sm:$0xff]
  %v875 = vld [vmem:[%s764 + $0xaa] sm:$0xff]
  %v876 = vld [vmem:[%s764 + $0xb2] sm:$0xff]
  %v877 = vmul.f32 %v861, %v413
  %v878 = vmul.f32 %v862, %v413
  %v879 = vmul.f32 %v863, %v413
  %v880 = vmul.f32 %v864, %v413
  %v881 = vmul.f32 %v865, %v413
  %v882 = vmul.f32 %v866, %v413
  %v883 = vmul.f32 %v867, %v413
  %v884 = vmul.f32 %v868, %v413
  %v885 = vmul.f32 %v869, %v413
  %v886 = vmul.f32 %v870, %v413
  %v887 = vmul.f32 %v871, %v413
  %v888 = vmul.f32 %v872, %v413
  %v889 = vmul.f32 %v873, %v413
  %v890 = vmul.f32 %v874, %v413
  %v891 = vmul.f32 %v875, %v413
  %v892 = vmul.f32 %v876, %v413
  %v893 = vadd.f32 %v845, %v877
  %v894 = vadd.f32 %v846, %v878
  %v895 = vadd.f32 %v847, %v879
  %v896 = vadd.f32 %v848, %v880
  %v897 = vadd.f32 %v849, %v881
  %v898 = vadd.f32 %v850, %v882
  %v899 = vadd.f32 %v851, %v883
  %v900 = vadd.f32 %v852, %v884
  %v901 = vadd.f32 %v853, %v885
  %v902 = vadd.f32 %v854, %v886
  %v903 = vadd.f32 %v855, %v887
  %v904 = vadd.f32 %v856, %v888
  %v905 = vadd.f32 %v857, %v889
  %v906 = vadd.f32 %v858, %v890
  %v907 = vadd.f32 %v859, %v891
  %v908 = vadd.f32 %v860, %v892
  %s909 = scalar_lea.vmem [#allocation2], 240
  %v910 = vld [vmem:[%s909] sm:$0xff]
  %v911 = vld [vmem:[%s909 + $0x8] sm:$0xff]
  %v912 = vld [vmem:[%s909 + $0x18] sm:$0xff]
  %v913 = vld [vmem:[%s909 + $0x20] sm:$0xff]
  %v914 = vld [vmem:[%s909 + $0x30] sm:$0xff]
  %v915 = vld [vmem:[%s909 + $0x38] sm:$0xff]
  %v916 = vld [vmem:[%s909 + $0x48] sm:$0xff]
  %v917 = vld [vmem:[%s909 + $0x50] sm:$0xff]
  %v918 = vld [vmem:[%s909 + $0x60] sm:$0xff]
  %v919 = vld [vmem:[%s909 + $0x68] sm:$0xff]
  %v920 = vld [vmem:[%s909 + $0x78] sm:$0xff]
  %v921 = vld [vmem:[%s909 + $0x80] sm:$0xff]
  %v922 = vld [vmem:[%s909 + $0x90] sm:$0xff]
  %v923 = vld [vmem:[%s909 + $0x98] sm:$0xff]
  %v924 = vld [vmem:[%s909 + $0xa8] sm:$0xff]
  %v925 = vld [vmem:[%s909 + $0xb0] sm:$0xff]
  %v926 = vmul.f32 %v910, %v466
  %v927 = vmul.f32 %v911, %v466
  %v928 = vmul.f32 %v912, %v466
  %v929 = vmul.f32 %v913, %v466
  %v930 = vmul.f32 %v914, %v466
  %v931 = vmul.f32 %v915, %v466
  %v932 = vmul.f32 %v916, %v466
  %v933 = vmul.f32 %v917, %v466
  %v934 = vmul.f32 %v918, %v466
  %v935 = vmul.f32 %v919, %v466
  %v936 = vmul.f32 %v920, %v466
  %v937 = vmul.f32 %v921, %v466
  %v938 = vmul.f32 %v922, %v466
  %v939 = vmul.f32 %v923, %v466
  %v940 = vmul.f32 %v924, %v466
  %v941 = vmul.f32 %v925, %v466
  %v942 = vadd.f32 %v893, %v926
  %v943 = vadd.f32 %v894, %v927
  %v944 = vadd.f32 %v895, %v928
  %v945 = vadd.f32 %v896, %v929
  %v946 = vadd.f32 %v897, %v930
  %v947 = vadd.f32 %v898, %v931
  %v948 = vadd.f32 %v899, %v932
  %v949 = vadd.f32 %v900, %v933
  %v950 = vadd.f32 %v901, %v934
  %v951 = vadd.f32 %v902, %v935
  %v952 = vadd.f32 %v903, %v936
  %v953 = vadd.f32 %v904, %v937
  %v954 = vadd.f32 %v905, %v938
  %v955 = vadd.f32 %v906, %v939
  %v956 = vadd.f32 %v907, %v940
  %v957 = vadd.f32 %v908, %v941
  %v958 = vld [vmem:[%s909 + $0x1] sm:$0xff]
  %v959 = vld [vmem:[%s909 + $0x9] sm:$0xff]
  %v960 = vld [vmem:[%s909 + $0x19] sm:$0xff]
  %v961 = vld [vmem:[%s909 + $0x21] sm:$0xff]
  %v962 = vld [vmem:[%s909 + $0x31] sm:$0xff]
  %v963 = vld [vmem:[%s909 + $0x39] sm:$0xff]
  %v964 = vld [vmem:[%s909 + $0x49] sm:$0xff]
  %v965 = vld [vmem:[%s909 + $0x51] sm:$0xff]
  %v966 = vld [vmem:[%s909 + $0x61] sm:$0xff]
  %v967 = vld [vmem:[%s909 + $0x69] sm:$0xff]
  %v968 = vld [vmem:[%s909 + $0x79] sm:$0xff]
  %v969 = vld [vmem:[%s909 + $0x81] sm:$0xff]
  %v970 = vld [vmem:[%s909 + $0x91] sm:$0xff]
  %v971 = vld [vmem:[%s909 + $0x99] sm:$0xff]
  %v972 = vld [vmem:[%s909 + $0xa9] sm:$0xff]
  %v973 = vld [vmem:[%s909 + $0xb1] sm:$0xff]
  %v974 = vmul.f32 %v958, %v518
  %v975 = vmul.f32 %v959, %v518
  %v976 = vmul.f32 %v960, %v518
  %v977 = vmul.f32 %v961, %v518
  %v978 = vmul.f32 %v962, %v518
  %v979 = vmul.f32 %v963, %v518
  %v980 = vmul.f32 %v964, %v518
  %v981 = vmul.f32 %v965, %v518
  %v982 = vmul.f32 %v966, %v518
  %v983 = vmul.f32 %v967, %v518
  %v984 = vmul.f32 %v968, %v518
  %v985 = vmul.f32 %v969, %v518
  %v986 = vmul.f32 %v970, %v518
  %v987 = vmul.f32 %v971, %v518
  %v988 = vmul.f32 %v972, %v518
  %v989 = vmul.f32 %v973, %v518
  %v990 = vadd.f32 %v942, %v974
  %v991 = vadd.f32 %v943, %v975
  %v992 = vadd.f32 %v944, %v976
  %v993 = vadd.f32 %v945, %v977
  %v994 = vadd.f32 %v946, %v978
  %v995 = vadd.f32 %v947, %v979
  %v996 = vadd.f32 %v948, %v980
  %v997 = vadd.f32 %v949, %v981
  %v998 = vadd.f32 %v950, %v982
  %v999 = vadd.f32 %v951, %v983
  %v1000 = vadd.f32 %v952, %v984
  %v1001 = vadd.f32 %v953, %v985
  %v1002 = vadd.f32 %v954, %v986
  %v1003 = vadd.f32 %v955, %v987
  %v1004 = vadd.f32 %v956, %v988
  %v1005 = vadd.f32 %v957, %v989
  %v1006 = vld [vmem:[%s909 + $0x2] sm:$0xff]
  %v1007 = vld [vmem:[%s909 + $0xa] sm:$0xff]
  %v1008 = vld [vmem:[%s909 + $0x1a] sm:$0xff]
  %v1009 = vld [vmem:[%s909 + $0x22] sm:$0xff]
  %v1010 = vld [vmem:[%s909 + $0x32] sm:$0xff]
  %v1011 = vld [vmem:[%s909 + $0x3a] sm:$0xff]
  %v1012 = vld [vmem:[%s909 + $0x4a] sm:$0xff]
  %v1013 = vld [vmem:[%s909 + $0x52] sm:$0xff]
  %v1014 = vld [vmem:[%s909 + $0x62] sm:$0xff]
  %v1015 = vld [vmem:[%s909 + $0x6a] sm:$0xff]
  %v1016 = vld [vmem:[%s909 + $0x7a] sm:$0xff]
  %v1017 = vld [vmem:[%s909 + $0x82] sm:$0xff]
  %v1018 = vld [vmem:[%s909 + $0x92] sm:$0xff]
  %v1019 = vld [vmem:[%s909 + $0x9a] sm:$0xff]
  %v1020 = vld [vmem:[%s909 + $0xaa] sm:$0xff]
  %v1021 = vld [vmem:[%s909 + $0xb2] sm:$0xff]
  %v1022 = vmul.f32 %v1006, %v570
  %v1023 = vmul.f32 %v1007, %v570
  %v1024 = vmul.f32 %v1008, %v570
  %v1025 = vmul.f32 %v1009, %v570
  %v1026 = vmul.f32 %v1010, %v570
  %v1027 = vmul.f32 %v1011, %v570
  %v1028 = vmul.f32 %v1012, %v570
  %v1029 = vmul.f32 %v1013, %v570
  %v1030 = vmul.f32 %v1014, %v570
  %v1031 = vmul.f32 %v1015, %v570
  %v1032 = vmul.f32 %v1016, %v570
  %v1033 = vmul.f32 %v1017, %v570
  %v1034 = vmul.f32 %v1018, %v570
  %v1035 = vmul.f32 %v1019, %v570
  %v1036 = vmul.f32 %v1020, %v570
  %v1037 = vmul.f32 %v1021, %v570
  %v1038 = vadd.f32 %v990, %v1022
  %v1039 = vadd.f32 %v991, %v1023
  %v1040 = vadd.f32 %v992, %v1024
  %v1041 = vadd.f32 %v993, %v1025
  %v1042 = vadd.f32 %v994, %v1026
  %v1043 = vadd.f32 %v995, %v1027
  %v1044 = vadd.f32 %v996, %v1028
  %v1045 = vadd.f32 %v997, %v1029
  %v1046 = vadd.f32 %v998, %v1030
  %v1047 = vadd.f32 %v999, %v1031
  %v1048 = vadd.f32 %v1000, %v1032
  %v1049 = vadd.f32 %v1001, %v1033
  %v1050 = vadd.f32 %v1002, %v1034
  %v1051 = vadd.f32 %v1003, %v1035
  %v1052 = vadd.f32 %v1004, %v1036
  %v1053 = vadd.f32 %v1005, %v1037
  %s1054 = scalar_lea.vmem %s3, 128
  %1055 = vst.msk [vmem:[%s1054] sm:$0xff] %vm14, %v1038
  %1056 = vst.msk [vmem:[%s1054 + $0x8] sm:$0xff] %vm14, %v1039
  %1057 = vst.msk [vmem:[%s1054 + $0x10] sm:$0xff] %vm14, %v1040
  %1058 = vst.msk [vmem:[%s1054 + $0x18] sm:$0xff] %vm14, %v1041
  %1059 = vst.msk [vmem:[%s1054 + $0x20] sm:$0xff] %vm14, %v1042
  %1060 = vst.msk [vmem:[%s1054 + $0x28] sm:$0xff] %vm14, %v1043
  %1061 = vst.msk [vmem:[%s1054 + $0x30] sm:$0xff] %vm14, %v1044
  %1062 = vst.msk [vmem:[%s1054 + $0x38] sm:$0xff] %vm14, %v1045
  %1063 = vst.msk [vmem:[%s1054 + $0x40] sm:$0xff] %vm14, %v1046
  %1064 = vst.msk [vmem:[%s1054 + $0x48] sm:$0xff] %vm14, %v1047
  %1065 = vst.msk [vmem:[%s1054 + $0x50] sm:$0xff] %vm14, %v1048
  %1066 = vst.msk [vmem:[%s1054 + $0x58] sm:$0xff] %vm14, %v1049
  %1067 = vst.msk [vmem:[%s1054 + $0x60] sm:$0xff] %vm14, %v1050
  %1068 = vst.msk [vmem:[%s1054 + $0x68] sm:$0xff] %vm14, %v1051
  %1069 = vst.msk [vmem:[%s1054 + $0x70] sm:$0xff] %vm14, %v1052
  %1070 = vst.msk [vmem:[%s1054 + $0x78] sm:$0xff] %vm14, %v1053
  // Predicated region
  $region14: #{tpu_custom_call.1} parent=0 // pred_check
    _
  $region15: #{tpu_custom_call.1} parent=0 // pred_check_branch
    %1072 = sbr.rel (0) target = $region17
  $region16: #{tpu_custom_call.1} parent=0 // pred_region
    _
  $region17: #{tpu_custom_call.1} parent=0 // pred_fallthru
    _
  // Predicated region
  $region18: #{tpu_custom_call.1} parent=0 // pred_check
    _
  $region19: #{tpu_custom_call.1} parent=0 // pred_check_branch
    %1074 = sbr.rel (0) target = $region21
  $region20: #{tpu_custom_call.1} parent=0 // pred_region
    _
  $region21: #{tpu_custom_call.1} parent=0 // pred_fallthru
    _

</llo_original>
